<compile_context>
chip_gen: v7x
topology: tpu7x:2x2x1
jax: 0.10.0
libtpu: 0.0.40
codegen_flags: <defaults>
</compile_context>

<pallas_src>
import jax
import jax.numpy as jnp
from jax import lax
from jax.experimental import pallas as pl
from jax.experimental.pallas import tpu as pltpu


def _round_up(x, m):
    return (x + m - 1) // m * m


# ----------------------------------------------------------------------------
# Fused kernel: seg_head Linear over (implicitly) concatenated features + CE
# ----------------------------------------------------------------------------
def _make_kernel(n_child, c0_p, child_cs_p, offs, k, k_pad, tm, with_loss):
    def kernel(*refs):
        p = 0
        f0_ref = refs[p]; p += 1                       # (tm, c0_p)
        child_refs = refs[p:p + n_child]; p += n_child  # (tm, c_lp) gathered child feats
        w_ref = refs[p]; p += 1                        # (c_total_p, k_pad), 8-aligned offs
        b_ref = refs[p]; p += 1                        # (1, k_pad)
        lab_ref = None
        if with_loss:
            lab_ref = refs[p]; p += 1                  # (tm, 1) int32
        logits_ref = refs[p]; p += 1                   # (tm, k_pad)
        loss_ref = None
        if with_loss:
            loss_ref = refs[p]; p += 1                 # (8, 128) per-tile partials

        # seg_head Linear.  Per-level dots (equivalent to concat(feat) @ W) with f32
        # accumulation; this kernel is memory-bound so the small per-level K is fine.
        acc = jnp.dot(f0_ref[...], w_ref[0:c0_p, :],
                      preferred_element_type=jnp.float32)              # (tm, k_pad)
        for l in range(n_child):
            off_l, cp = offs[l], child_cs_p[l]
            acc = acc + jnp.dot(child_refs[l][...], w_ref[off_l:off_l + cp, :],
                                preferred_element_type=jnp.float32)

        logits = acc + b_ref[...].astype(jnp.float32)                  # (tm, k_pad)
        logits_ref[...] = logits.astype(logits_ref.dtype)              # lane-dense store

        # CrossEntropy (ignore_index = -1) reduced to per-tile partial sums so the
        # grid can run fully in parallel; final mean is taken in glue JAX.
        if with_loss:
            labels = lab_ref[...]                                      # (tm, 1)
            col = lax.broadcasted_iota(jnp.int32, (tm, k_pad), 1)
            masked = jnp.where(col < k, logits, -1e30)                 # ignore padded classes
            m = jnp.max(masked, axis=-1, keepdims=True)
            lse = m + jnp.log(jnp.sum(jnp.exp(masked - m), axis=-1, keepdims=True))
            picked = jnp.sum(jnp.where(col == labels, logits, 0.0),
                             axis=-1, keepdims=True)                   # (tm, 1)
            valid = (labels >= 0).astype(jnp.float32)                  # (tm, 1)
            loss_sum = jnp.sum((lse - picked) * valid)
            valid_sum = jnp.sum(valid)
            row = lax.broadcasted_iota(jnp.int32, (8, 128), 0)
            loss_ref[...] = (jnp.where(row == 0, loss_sum, 0.0)
                             + jnp.where(row == 1, valid_sum, 0.0))

    return kernel


# ----------------------------------------------------------------------------
# DefaultSegmentorV2.forward  (eval-mode semantics)
# ----------------------------------------------------------------------------
def default_segmentor_v2_forward(point_dict, seg_w, seg_b, segment=None, tm=1024):
    """point_dict mimics the backbone's Point output:
         {'feat': (N_deep, C), 'pooling_inverse': (N_parent,), 'pooling_parent': {...}}
    """
    if not isinstance(point_dict, dict):
        point_dict = {"feat": point_dict}

    # --- flatten the pooling chain (torch while-loop) ---
    feats = [point_dict["feat"]]
    invs = []
    node = point_dict
    while "pooling_parent" in node:
        invs.append(node["pooling_inverse"])
        node = node["pooling_parent"]
        feats.append(node["feat"])

    f0 = feats[-1]                      # shallowest level: rows of the final feature
    child_feats = feats[-2::-1]         # channel order matches the torch concat chain
    n_child = len(child_feats)

    # --- compose inverse maps shallow -> deep (tiny int gathers) ---
    comps = []
    cur = None
    for inv in invs[::-1]:
        inv = inv.astype(jnp.int32)
        cur = inv if cur is None else jnp.take(inv, cur, axis=0, mode="clip")
        comps.append(cur)

    n0, c0 = f0.shape
    k = int(seg_w.shape[1])
    child_cs = [int(cf.shape[1]) for cf in child_feats]
    c_total = c0 + sum(child_cs)
    assert seg_w.shape[0] == c_total, "seg_head in_features must match concatenated feat"

    # --- un-pooling gathers (torch: point.feat[inverse]); vectorized, no per-row loop.
    # OOB indices are clamped (torch would raise) -- documented behaviour.
    gathered = [jnp.take(cf, comp, axis=0, mode="clip")
                for cf, comp in zip(child_feats, comps)]

    with_loss = segment is not None
    feat_dtype = f0.dtype

    # --- class dim padded to a full lane width (lane-dense stores, full MXU N) ---
    k_pad = max(128, _round_up(k, 128))

    # --- per-level channels padded to 8-aligned offsets inside the packed weight ---
    c0_p = _round_up(c0, 8)
    child_cs_p = [_round_up(c, 8) for c in child_cs]
    offs = []
    off = c0_p
    for cp in child_cs_p:
        offs.append(off)
        off += cp
    c_total_p = off

    # --- row tiling: pad N to a tile multiple and mask (labels = -1 on padding) ---
    tm = max(8, min(_round_up(int(tm), 8), _round_up(n0, 8)))
    n_pad = _round_up(n0, tm)
    grid = (n_pad // tm,)

    def pad_rc(x, cp):
        return jnp.pad(x, ((0, n_pad - x.shape[0]), (0, cp - x.shape[1])))

    f0_p = pad_rc(f0, c0_p)
    gath_p = [pad_rc(g, cp) for g, cp in zip(gathered, child_cs_p)]

    # packed weight: real rows placed at 8-aligned per-level offsets, zero elsewhere
    w = jnp.zeros((c_total_p, k_pad), dtype=seg_w.dtype)
    w = w.at[:c0, :k].set(seg_w[:c0])
    src = c0
    for off_l, c in zip(offs, child_cs):
        w = w.at[off_l:off_l + c, :k].set(seg_w[src:src + c])
        src += c
    b = jnp.zeros((1, k_pad), dtype=seg_b.dtype).at[0, :k].set(seg_b)

    in_specs = [pl.BlockSpec((tm, c0_p), lambda i: (i, 0))]
    in_specs += [pl.BlockSpec((tm, cp), lambda i: (i, 0)) for cp in child_cs_p]
    in_specs += [pl.BlockSpec((c_total_p, k_pad), lambda i: (0, 0)),   # W resident block
                 pl.BlockSpec((1, k_pad), lambda i: (0, 0))]           # bias
    args = [f0_p] + gath_p + [w, b]

    out_shapes = [jax.ShapeDtypeStruct((n_pad, k_pad), feat_dtype)]
    out_specs = [pl.BlockSpec((tm, k_pad), lambda i: (i, 0))]

    if with_loss:
        lab = jnp.pad(segment.astype(jnp.int32), (0, n_pad - n0),
                      constant_values=-1).reshape(n_pad, 1)
        in_specs.append(pl.BlockSpec((tm, 1), lambda i: (i, 0)))
        args.append(lab)
        # per-tile partials in an (8,128)-aligned block: row 0 = loss sum, row 1 = valid
        out_shapes.append(jax.ShapeDtypeStruct((grid[0], 8, 128), jnp.float32))
        out_specs.append(pl.BlockSpec((None, 8, 128), lambda i: (i, 0, 0)))

    kernel = _make_kernel(n_child, c0_p, child_cs_p, offs, k, k_pad, tm, with_loss)

    outs = pl.pallas_call(
        kernel,
        out_shape=tuple(out_shapes),
        grid_spec=pltpu.PrefetchScalarGridSpec(
            num_scalar_prefetch=0,
            grid=grid,
            in_specs=in_specs,
            out_specs=tuple(out_specs),
        ),
        compiler_params=pltpu.CompilerParams(
            dimension_semantics=("parallel",),            # no cross-tile state -> megacore OK
            vmem_limit_bytes=32 * 1024 * 1024,
        ),
    )(*args)

    return_dict = {}
    if with_loss:
        logits_p, loss_parts = outs
        loss_sum = jnp.sum(loss_parts[:, 0, 0])
        valid_sum = jnp.sum(loss_parts[:, 1, 0])
        return_dict["loss"] = loss_sum / jnp.maximum(valid_sum, 1.0)
        return_dict["seg_logits"] = logits_p[:n0, :k]
    else:
        return_dict["seg_logits"] = outs[0][:n0, :k]
    return return_dict


# ----------------------------------------------------------------------------
# Pure-JAX reference for verification
# ----------------------------------------------------------------------------
def _reference(point_dict, seg_w, seg_b, segment):
    point = point_dict
    while "pooling_parent" in point:
        parent = dict(point["pooling_parent"])
        inverse = point["pooling_inverse"]
        parent["feat"] = jnp.concatenate(
            [parent["feat"], point["feat"][inverse]], axis=-1)
        point = parent
    feat = point["feat"]
    logits = feat @ seg_w + seg_b
    lse = jax.scipy.special.logsumexp(logits, axis=-1)
    picked = jnp.take_along_axis(
        logits, jnp.clip(segment, 0, None)[:, None], axis=-1)[:, 0]
    valid = (segment >= 0).astype(jnp.float32)
    loss = jnp.sum((lse - picked) * valid) / jnp.maximum(jnp.sum(valid), 1.0)
    return logits, loss


if __name__ == "__main__":
    key = jax.random.PRNGKey(0)
    k0, k1, k2, k3, k4, k5, k6, k7 = jax.random.split(key, 8)

    # synthetic multi-level backbone output (3 levels of pooling hierarchy)
    n0, n1, n2 = 256, 128, 64          # points per level (shallow -> deep)
    c_lvl = 32                         # per-level feature channels
    num_classes = 16
    backbone_out_channels = 3 * c_lvl  # 96 after the two concat steps

    f0 = jax.random.normal(k0, (n0, c_lvl), dtype=jnp.float32)
    f1 = jax.random.normal(k1, (n1, c_lvl), dtype=jnp.float32)
    f2 = jax.random.normal(k2, (n2, c_lvl), dtype=jnp.float32)
    inv1 = jax.random.randint(k3, (n0,), 0, n1, dtype=jnp.int32)  # level-0 rows -> level-1 rows
    inv2 = jax.random.randint(k4, (n1,), 0, n2, dtype=jnp.int32)  # level-1 rows -> level-2 rows
    segment = jax.random.randint(k5, (n0,), -1, num_classes, dtype=jnp.int32)

    # seg_head = nn.Linear(backbone_out_channels, num_classes)
    bound = 1.0 / (backbone_out_channels ** 0.5)
    seg_w = jax.random.uniform(k6, (backbone_out_channels, num_classes),
                               dtype=jnp.float32, minval=-bound, maxval=bound)
    seg_b = jax.random.uniform(k7, (num_classes,),
                               dtype=jnp.float32, minval=-bound, maxval=bound)

    # Point-like nested dict as produced by the backbone
    point_dict = {
        "feat": f2,
        "pooling_inverse": inv2,
        "pooling_parent": {
            "feat": f1,
            "pooling_inverse": inv1,
            "pooling_parent": {"feat": f0},
        },
    }

    # tm=128 at these toy sizes so the grid has >1 step and the per-tile loss
    # partials / parallel grid are exercised; default tm=1024 for realistic clouds.
    out = default_segmentor_v2_forward(point_dict, seg_w, seg_b, segment=segment, tm=128)
    jax.block_until_ready(out["seg_logits"])
    jax.block_until_ready(out["loss"])

    ref_logits, ref_loss = _reference(point_dict, seg_w, seg_b, segment)
    assert out["seg_logits"].shape == (n0, num_classes)
    assert jnp.allclose(out["seg_logits"], ref_logits, atol=1e-2, rtol=1e-2)
    assert jnp.allclose(out["loss"], ref_loss, atol=1e-2, rtol=1e-2)

    # inference path (no segment): logits-only kernel, no CE math / loss outputs
    out_eval = default_segmentor_v2_forward(point_dict, seg_w, seg_b, segment=None, tm=128)
    jax.block_until_ready(out_eval["seg_logits"])
    assert "loss" not in out_eval
    assert jnp.allclose(out_eval["seg_logits"], ref_logits, atol=1e-2, rtol=1e-2)

    print("KERNEL_OK")
</pallas_src>

<mosaic_0001>
module attributes {stable_mosaic.version = 11 : i64} {
  func.func @kernel(%arg0: i32, %arg1: memref<128x32xf32, #tpu.memory_space<vmem>>, %arg2: memref<128x32xf32, #tpu.memory_space<vmem>>, %arg3: memref<128x32xf32, #tpu.memory_space<vmem>>, %arg4: memref<96x128xf32, #tpu.memory_space<vmem>>, %arg5: memref<1x128xf32, #tpu.memory_space<vmem>>, %arg6: memref<128x1xi32, #tpu.memory_space<vmem>>, %arg7: memref<128x128xf32, #tpu.memory_space<vmem>>, %arg8: memref<1x8x128xf32, #tpu.memory_space<vmem>>) attributes {dimension_semantics = [#tpu.dimension_semantics<parallel>], iteration_bounds = array<i64: 2>, scalar_prefetch = 0 : i64, scratch_operands = 0 : i64, tpu.core_type = #tpu.core_type<tc>, window_params = [{transform_indices = @transform_0, window_bounds = array<i64: 128, 32>}, {transform_indices = @transform_1, window_bounds = array<i64: 128, 32>}, {transform_indices = @transform_2, window_bounds = array<i64: 128, 32>}, {pipeline_mode = #tpu.pipeline_mode<synchronous>, transform_indices = @transform_3, window_bounds = array<i64: 96, 128>}, {pipeline_mode = #tpu.pipeline_mode<synchronous>, transform_indices = @transform_4, window_bounds = array<i64: 1, 128>}, {transform_indices = @transform_5, window_bounds = array<i64: 128, 1>}, {transform_indices = @transform_6, window_bounds = array<i64: 128, 128>}, {transform_indices = @transform_7, window_bounds = array<i64: 1, 8, 128>}]} {
    %c0 = arith.constant 0 : index
    %c0_0 = arith.constant 0 : index
    %0 = vector.load %arg1[%c0, %c0_0] : memref<128x32xf32, #tpu.memory_space<vmem>>, vector<128x32xf32>
    %c0_1 = arith.constant 0 : index
    %c0_2 = arith.constant 0 : index
    %1 = vector.load %arg4[%c0_1, %c0_2] : memref<96x128xf32, #tpu.memory_space<vmem>>, vector<32x128xf32>
    %cst = arith.constant dense<0.000000e+00> : vector<128x128xf32>
    %2 = tpu.matmul %0, %1, %cst {dimension_numbers = #tpu.dot_dimension_numbers<[1], [0], [0], [1], [0, 0, 1, 1], [], []>} : vector<128x32xf32>, vector<32x128xf32>, vector<128x128xf32> -> vector<128x128xf32>
    %c0_3 = arith.constant 0 : index
    %c0_4 = arith.constant 0 : index
    %3 = vector.load %arg2[%c0_3, %c0_4] : memref<128x32xf32, #tpu.memory_space<vmem>>, vector<128x32xf32>
    %c32 = arith.constant 32 : index
    %c0_5 = arith.constant 0 : index
    %4 = vector.load %arg4[%c32, %c0_5] : memref<96x128xf32, #tpu.memory_space<vmem>>, vector<32x128xf32>
    %cst_6 = arith.constant dense<0.000000e+00> : vector<128x128xf32>
    %5 = tpu.matmul %3, %4, %cst_6 {dimension_numbers = #tpu.dot_dimension_numbers<[1], [0], [0], [1], [0, 0, 1, 1], [], []>} : vector<128x32xf32>, vector<32x128xf32>, vector<128x128xf32> -> vector<128x128xf32>
    %6 = arith.addf %2, %5 : vector<128x128xf32>
    %c0_7 = arith.constant 0 : index
    %c0_8 = arith.constant 0 : index
    %7 = vector.load %arg3[%c0_7, %c0_8] : memref<128x32xf32, #tpu.memory_space<vmem>>, vector<128x32xf32>
    %c64 = arith.constant 64 : index
    %c0_9 = arith.constant 0 : index
    %8 = vector.load %arg4[%c64, %c0_9] : memref<96x128xf32, #tpu.memory_space<vmem>>, vector<32x128xf32>
    %cst_10 = arith.constant dense<0.000000e+00> : vector<128x128xf32>
    %9 = tpu.matmul %7, %8, %cst_10 {dimension_numbers = #tpu.dot_dimension_numbers<[1], [0], [0], [1], [0, 0, 1, 1], [], []>} : vector<128x32xf32>, vector<32x128xf32>, vector<128x128xf32> -> vector<128x128xf32>
    %10 = arith.addf %6, %9 : vector<128x128xf32>
    %c0_11 = arith.constant 0 : index
    %c0_12 = arith.constant 0 : index
    %11 = vector.load %arg5[%c0_11, %c0_12] : memref<1x128xf32, #tpu.memory_space<vmem>>, vector<1x128xf32>
    %12 = vector.broadcast %11 : vector<1x128xf32> to vector<128x128xf32>
    %13 = arith.addf %10, %12 : vector<128x128xf32>
    %c0_13 = arith.constant 0 : index
    %c0_14 = arith.constant 0 : index
    %14 = vector.load %arg7[%c0_13, %c0_14] : memref<128x128xf32, #tpu.memory_space<vmem>>, vector<128x128xf32>
    tpu.vector_store %arg7[%c0_13, %c0_14], %13 {strides = array<i32>} : memref<128x128xf32, #tpu.memory_space<vmem>>, vector<128x128xf32>,
    %c0_15 = arith.constant 0 : index
    %c0_16 = arith.constant 0 : index
    %15 = vector.load %arg6[%c0_15, %c0_16] : memref<128x1xi32, #tpu.memory_space<vmem>>, vector<128x1xi32>
    %16 = tpu.iota {dimensions = array<i32: 1>} : vector<128x128xi32>
    %c16_i32 = arith.constant 16 : i32
    %17 = vector.broadcast %c16_i32 : i32 to vector<128x128xi32>
    %18 = arith.cmpi slt, %16, %17 : vector<128x128xi32>
    %cst_17 = arith.constant -1.000000e+30 : f32
    %19 = vector.broadcast %cst_17 : f32 to vector<128x128xf32>
    %20 = arith.select %18, %13, %19 : vector<128x128xi1>, vector<128x128xf32>
    %cst_18 = arith.constant dense<0xFF800000> : vector<128xf32>
    %21 = vector.multi_reduction <maximumf>, %20, %cst_18 [1] : vector<128x128xf32> to vector<128xf32>
    %22 = vector.shape_cast %21 : vector<128xf32> to vector<128x1xf32>
    %23 = vector.broadcast %22 : vector<128x1xf32> to vector<128x128xf32>
    %24 = arith.subf %20, %23 : vector<128x128xf32>
    %25 = math.exp %24 : vector<128x128xf32>
    %cst_19 = arith.constant dense<0.000000e+00> : vector<128xf32>
    %26 = vector.multi_reduction <add>, %25, %cst_19 [1] : vector<128x128xf32> to vector<128xf32>
    %27 = vector.shape_cast %26 : vector<128xf32> to vector<128x1xf32>
    %28 = math.log %27 : vector<128x1xf32>
    %29 = arith.addf %22, %28 : vector<128x1xf32>
    %30 = vector.broadcast %15 : vector<128x1xi32> to vector<128x128xi32>
    %31 = arith.cmpi eq, %16, %30 : vector<128x128xi32>
    %cst_20 = arith.constant 0.000000e+00 : f32
    %32 = vector.broadcast %cst_20 : f32 to vector<128x128xf32>
    %33 = arith.select %31, %13, %32 : vector<128x128xi1>, vector<128x128xf32>
    %cst_21 = arith.constant dense<0.000000e+00> : vector<128xf32>
    %34 = vector.multi_reduction <add>, %33, %cst_21 [1] : vector<128x128xf32> to vector<128xf32>
    %35 = vector.shape_cast %34 : vector<128xf32> to vector<128x1xf32>
    %c0_i32 = arith.constant 0 : i32
    %36 = vector.broadcast %c0_i32 : i32 to vector<128x1xi32>
    %37 = arith.cmpi sge, %15, %36 : vector<128x1xi32>
    %38 = arith.extui %37 : vector<128x1xi1> to vector<128x1xi32>
    %39 = arith.sitofp %38 : vector<128x1xi32> to vector<128x1xf32>
    %40 = arith.subf %29, %35 : vector<128x1xf32>
    %41 = arith.mulf %40, %39 : vector<128x1xf32>
    %42 = vector.shape_cast %41 : vector<128x1xf32> to vector<1x128x1xf32>
    %cst_22 = arith.constant dense<0.000000e+00> : vector<1xf32>
    %43 = vector.multi_reduction <add>, %42, %cst_22 [1, 2] : vector<1x128x1xf32> to vector<1xf32>
    %44 = vector.shape_cast %43 : vector<1xf32> to vector<1x1x1xf32>
    %45 = vector.extract %44[0, 0, 0] : f32 from vector<1x1x1xf32>
    %46 = vector.shape_cast %39 : vector<128x1xf32> to vector<1x128x1xf32>
    %cst_23 = arith.constant dense<0.000000e+00> : vector<1xf32>
    %47 = vector.multi_reduction <add>, %46, %cst_23 [1, 2] : vector<1x128x1xf32> to vector<1xf32>
    %48 = vector.shape_cast %47 : vector<1xf32> to vector<1x1x1xf32>
    %49 = vector.extract %48[0, 0, 0] : f32 from vector<1x1x1xf32>
    %50 = tpu.iota {dimensions = array<i32: 0>} : vector<8x128xi32>
    %c0_i32_24 = arith.constant 0 : i32
    %51 = vector.broadcast %c0_i32_24 : i32 to vector<8x128xi32>
    %52 = arith.cmpi eq, %50, %51 : vector<8x128xi32>
    %cst_25 = arith.constant 0.000000e+00 : f32
    %53 = vector.broadcast %45 : f32 to vector<8x128xf32>
    %54 = vector.broadcast %cst_25 : f32 to vector<8x128xf32>
    %55 = arith.select %52, %53, %54 : vector<8x128xi1>, vector<8x128xf32>
    %c1_i32 = arith.constant 1 : i32
    %56 = vector.broadcast %c1_i32 : i32 to vector<8x128xi32>
    %57 = arith.cmpi eq, %50, %56 : vector<8x128xi32>
    %cst_26 = arith.constant 0.000000e+00 : f32
    %58 = vector.broadcast %49 : f32 to vector<8x128xf32>
    %59 = vector.broadcast %cst_26 : f32 to vector<8x128xf32>
    %60 = arith.select %57, %58, %59 : vector<8x128xi1>, vector<8x128xf32>
    %61 = arith.addf %55, %60 : vector<8x128xf32>
    %c0_27 = arith.constant 0 : index
    %c0_28 = arith.constant 0 : index
    %c0_29 = arith.constant 0 : index
    %62 = vector.load %arg8[%c0_27, %c0_28, %c0_29] : memref<1x8x128xf32, #tpu.memory_space<vmem>>, vector<1x8x128xf32>
    %63 = vector.shape_cast %62 : vector<1x8x128xf32> to vector<8x128xf32>
    %64 = vector.shape_cast %61 : vector<8x128xf32> to vector<1x8x128xf32>
    tpu.vector_store %arg8[%c0_27, %c0_28, %c0_29], %64 {strides = array<i32>} : memref<1x8x128xf32, #tpu.memory_space<vmem>>, vector<1x8x128xf32>,
    return
  }
  func.func @transform_0(%arg0: i32) -> (i32, i32) {
    %c0_i32 = arith.constant 0 : i32
    %c0_i32_0 = arith.constant 0 : i32
    return %arg0, %c0_i32 : i32, i32
  }
  func.func @transform_1(%arg0: i32) -> (i32, i32) {
    %c0_i32 = arith.constant 0 : i32
    %c0_i32_0 = arith.constant 0 : i32
    return %arg0, %c0_i32 : i32, i32
  }
  func.func @transform_2(%arg0: i32) -> (i32, i32) {
    %c0_i32 = arith.constant 0 : i32
    %c0_i32_0 = arith.constant 0 : i32
    return %arg0, %c0_i32 : i32, i32
  }
  func.func @transform_3(%arg0: i32) -> (i32, i32) {
    %c0_i32 = arith.constant 0 : i32
    %c0_i32_0 = arith.constant 0 : i32
    %c0_i32_1 = arith.constant 0 : i32
    return %c0_i32, %c0_i32_0 : i32, i32
  }
  func.func @transform_4(%arg0: i32) -> (i32, i32) {
    %c0_i32 = arith.constant 0 : i32
    %c0_i32_0 = arith.constant 0 : i32
    %c0_i32_1 = arith.constant 0 : i32
    return %c0_i32, %c0_i32_0 : i32, i32
  }
  func.func @transform_5(%arg0: i32) -> (i32, i32) {
    %c0_i32 = arith.constant 0 : i32
    %c0_i32_0 = arith.constant 0 : i32
    return %arg0, %c0_i32 : i32, i32
  }
  func.func @transform_6(%arg0: i32) -> (i32, i32) {
    %c0_i32 = arith.constant 0 : i32
    %c0_i32_0 = arith.constant 0 : i32
    return %arg0, %c0_i32 : i32, i32
  }
  func.func @transform_7(%arg0: i32) -> (i32, i32, i32) {
    %c0_i32 = arith.constant 0 : i32
    %c0_i32_0 = arith.constant 0 : i32
    %c0_i32_1 = arith.constant 0 : i32
    return %arg0, %c0_i32, %c0_i32_0 : i32, i32, i32
  }
}

</mosaic_0001>

<llo_original>
// kernel: tpu_custom_call.1
$region0: #{tpu_custom_call.1}
  #allocation0 [shape = 'u32[]', space=smem, size = 0x4, offset = 0x4, fixed_abs, tag = 'smem constant byte address 0x4 - core index']
  #allocation1 [shape = 'u32[144,128]{1,0:T(1,128)}', space=vmem, size = 0x12000, scoped, tag = 'internal scratch']
  %s0 = inlined_call_operand.vmem [shape: f32[256,32], index: 0, kind: input, shape index: {}]
  %s1 = inlined_call_operand.vmem [shape: f32[256,32], index: 1, kind: input, shape index: {}]
  %s2 = inlined_call_operand.vmem [shape: f32[256,32], index: 2, kind: input, shape index: {}]
  %s3 = inlined_call_operand.vmem [shape: f32[96,128], index: 3, kind: input, shape index: {}]
  %s4 = inlined_call_operand.vmem [shape: f32[1,128], index: 4, kind: input, shape index: {}]
  %s5 = inlined_call_operand.vmem [shape: s32[256,1], index: 5, kind: input, shape index: {}]
  %s6 = inlined_call_operand.hbm [shape: f32[256,128], index: 6, kind: output, shape index: {0}]
  %s7 = inlined_call_operand.hbm [shape: f32[2,8,128], index: 7, kind: output, shape index: {1}]
  %8 = xla_tuple %s6, %s7
  %s9 = sld [smem:[#allocation0]]
  $region65: #{tpu_custom_call.1} parent=0
    _
  %s11 = ssub.s32 1, %s9
  %s12 = scalar_select 0, %s11, %s9
  $region1: #{tpu_custom_call.1} parent=0
    #allocation2 [shape = 'u8[131072]{0}', space=vmem, size = 0x20000, scoped, tag = 'output window, operand 0']
    #allocation3 [shape = 's32[2]{0}', space=sflag, size = 0x8, scoped, tag = 'scoped memory for tpu_custom_call.1']
    #allocation4 [shape = 'u8[8192]{0}', space=vmem, size = 0x2000, scoped, tag = 'output window, operand 1']
    #allocation5 [shape = 's32[2]{0}', space=sflag, size = 0x8, scoped, tag = 'scoped memory for tpu_custom_call.1']
    %13 = vsyncpa [#allocation3], 0
    %s14 = scalar_lea.sflag [#allocation3], 1
    %15 = vsyncpa %s14, 0
    %16 = vsyncpa [#allocation5], 0
    %s17 = scalar_lea.sflag [#allocation5], 1
    %18 = vsyncpa %s17, 0
    loop: start=0, step=1, limit=4
    $region2: #{tpu_custom_call.1} parent=1 // loop_pre_header
      _
    $region3: #{tpu_custom_call.1} parent=1 // loop_header
      %s20 = sphi 0, %s24
      %p21 = scmp.ge.s32.totalorder %s20, 4
      %s30 = sphi 0, %s32
      %s33 = sphi 0, %s30
      %s34 = sphi 0, %s33
      %s50 = sphi 0, %s34
      %s56 = sphi 0, %s58
      %s59 = sphi 0, %s56
      %s60 = sphi 0, %s59
      %s76 = sphi 0, %s60
      %s82 = sphi 0, %s84
      %s85 = sphi 0, %s82
      %s86 = sphi 0, %s85
      %s102 = sphi 0, %s86
      %s106 = sphi 0, %s106
      %s108 = sphi 0, %s106
      %s109 = sphi 0, %s108
      %s123 = sphi 0, %s109
      %s127 = sphi 0, %s127
      %s129 = sphi 0, %s127
      %s130 = sphi 0, %s129
      %s144 = sphi 0, %s130
      %s150 = sphi 0, %s152
      %s153 = sphi 0, %s150
      %s154 = sphi 0, %s153
      %s170 = sphi 0, %s154
      %s176 = sphi 0, %s178
      %s179 = sphi 0, %s176
      %s180 = sphi 0, %s179
      %s196 = sphi 0, %s180
      %s202 = sphi 0, %s204
      %s205 = sphi 0, %s202
      %s206 = sphi 0, %s205
      %s222 = sphi 0, %s206
    $region4: #{tpu_custom_call.1} parent=1 // loop_header_branch
      %23 = sbr.rel (%p21) target = $region8
    $region5: #{tpu_custom_call.1} parent=1 // loop_body
      %s25 = ssub.s32 %s20, 1
      %s26 = ssub.s32 %s20, 2
      %s27 = sadd.s32 %s20, 1
      %s28 = ssub.s32 %s20, %s27
      %p29 = scmp.eq.s32.totalorder %s28, 0
      %s31 = sadd.s32 %s30, 1
      %s32 = scalar_select %p29, %s30, %s31
      %p35 = pneg %p29
      %p36 = scmp.eq.s32.totalorder %s20, 1
      %p37 = por %p35, %p36
      %p38 = scmp.ne.s32.totalorder %s30, %s33
      %p39 = scmp.eq.s32.totalorder %s20, 0
      %p40 = por %p38, %p39
      %p41 = scmp.ne.s32.totalorder %s30, %s33
      %p42 = scmp.eq.s32.totalorder %s25, 1
      %p43 = por %p41, %p42
      %p44 = scmp.ne.s32.totalorder %s33, %s34
      %p45 = scmp.eq.s32.totalorder %s25, 0
      %p46 = por %p44, %p45
      %p47 = scmp.ne.s32.totalorder %s33, %s34
      %p48 = scmp.eq.s32.totalorder %s26, 1
      %p49 = por %p47, %p48
      %p51 = scmp.ne.s32.totalorder %s34, %s50
      %p52 = scmp.eq.s32.totalorder %s26, 0
      %p53 = por %p51, %p52
      %s54 = ssub.s32 %s20, %s27
      %p55 = scmp.eq.s32.totalorder %s54, 0
      %s57 = sadd.s32 %s56, 1
      %s58 = scalar_select %p55, %s56, %s57
      %p61 = pneg %p55
      %p62 = scmp.eq.s32.totalorder %s20, 1
      %p63 = por %p61, %p62
      %p64 = scmp.ne.s32.totalorder %s56, %s59
      %p65 = scmp.eq.s32.totalorder %s20, 0
      %p66 = por %p64, %p65
      %p67 = scmp.ne.s32.totalorder %s56, %s59
      %p68 = scmp.eq.s32.totalorder %s25, 1
      %p69 = por %p67, %p68
      %p70 = scmp.ne.s32.totalorder %s59, %s60
      %p71 = scmp.eq.s32.totalorder %s25, 0
      %p72 = por %p70, %p71
      %p73 = scmp.ne.s32.totalorder %s59, %s60
      %p74 = scmp.eq.s32.totalorder %s26, 1
      %p75 = por %p73, %p74
      %p77 = scmp.ne.s32.totalorder %s60, %s76
      %p78 = scmp.eq.s32.totalorder %s26, 0
      %p79 = por %p77, %p78
      %s80 = ssub.s32 %s20, %s27
      %p81 = scmp.eq.s32.totalorder %s80, 0
      %s83 = sadd.s32 %s82, 1
      %s84 = scalar_select %p81, %s82, %s83
      %p87 = pneg %p81
      %p88 = scmp.eq.s32.totalorder %s20, 1
      %p89 = por %p87, %p88
      %p90 = scmp.ne.s32.totalorder %s82, %s85
      %p91 = scmp.eq.s32.totalorder %s20, 0
      %p92 = por %p90, %p91
      %p93 = scmp.ne.s32.totalorder %s82, %s85
      %p94 = scmp.eq.s32.totalorder %s25, 1
      %p95 = por %p93, %p94
      %p96 = scmp.ne.s32.totalorder %s85, %s86
      %p97 = scmp.eq.s32.totalorder %s25, 0
      %p98 = por %p96, %p97
      %p99 = scmp.ne.s32.totalorder %s85, %s86
      %p100 = scmp.eq.s32.totalorder %s26, 1
      %p101 = por %p99, %p100
      %p103 = scmp.ne.s32.totalorder %s86, %s102
      %p104 = scmp.eq.s32.totalorder %s26, 0
      %p105 = por %p103, %p104
      %s107 = sadd.s32 %s106, 1
      %p110 = scmp.eq.s32.totalorder %s20, 1
      %p111 = scmp.ne.s32.totalorder %s106, %s108
      %p112 = scmp.eq.s32.totalorder %s20, 0
      %p113 = por %p111, %p112
      %p114 = scmp.ne.s32.totalorder %s106, %s108
      %p115 = scmp.eq.s32.totalorder %s25, 1
      %p116 = por %p114, %p115
      %p117 = scmp.ne.s32.totalorder %s108, %s109
      %p118 = scmp.eq.s32.totalorder %s25, 0
      %p119 = por %p117, %p118
      %p120 = scmp.ne.s32.totalorder %s108, %s109
      %p121 = scmp.eq.s32.totalorder %s26, 1
      %p122 = por %p120, %p121
      %p124 = scmp.ne.s32.totalorder %s109, %s123
      %p125 = scmp.eq.s32.totalorder %s26, 0
      %p126 = por %p124, %p125
      %s128 = sadd.s32 %s127, 1
      %p131 = scmp.eq.s32.totalorder %s20, 1
      %p132 = scmp.ne.s32.totalorder %s127, %s129
      %p133 = scmp.eq.s32.totalorder %s20, 0
      %p134 = por %p132, %p133
      %p135 = scmp.ne.s32.totalorder %s127, %s129
      %p136 = scmp.eq.s32.totalorder %s25, 1
      %p137 = por %p135, %p136
      %p138 = scmp.ne.s32.totalorder %s129, %s130
      %p139 = scmp.eq.s32.totalorder %s25, 0
      %p140 = por %p138, %p139
      %p141 = scmp.ne.s32.totalorder %s129, %s130
      %p142 = scmp.eq.s32.totalorder %s26, 1
      %p143 = por %p141, %p142
      %p145 = scmp.ne.s32.totalorder %s130, %s144
      %p146 = scmp.eq.s32.totalorder %s26, 0
      %p147 = por %p145, %p146
      %s148 = ssub.s32 %s20, %s27
      %p149 = scmp.eq.s32.totalorder %s148, 0
      %s151 = sadd.s32 %s150, 1
      %s152 = scalar_select %p149, %s150, %s151
      %p155 = pneg %p149
      %p156 = scmp.eq.s32.totalorder %s20, 1
      %p157 = por %p155, %p156
      %p158 = scmp.ne.s32.totalorder %s150, %s153
      %p159 = scmp.eq.s32.totalorder %s20, 0
      %p160 = por %p158, %p159
      %p161 = scmp.ne.s32.totalorder %s150, %s153
      %p162 = scmp.eq.s32.totalorder %s25, 1
      %p163 = por %p161, %p162
      %p164 = scmp.ne.s32.totalorder %s153, %s154
      %p165 = scmp.eq.s32.totalorder %s25, 0
      %p166 = por %p164, %p165
      %p167 = scmp.ne.s32.totalorder %s153, %s154
      %p168 = scmp.eq.s32.totalorder %s26, 1
      %p169 = por %p167, %p168
      %p171 = scmp.ne.s32.totalorder %s154, %s170
      %p172 = scmp.eq.s32.totalorder %s26, 0
      %p173 = por %p171, %p172
      %s174 = ssub.s32 %s20, %s27
      %p175 = scmp.eq.s32.totalorder %s174, 0
      %s177 = sadd.s32 %s176, 1
      %s178 = scalar_select %p175, %s176, %s177
      %p181 = pneg %p175
      %p182 = scmp.eq.s32.totalorder %s20, 1
      %p183 = por %p181, %p182
      %p184 = scmp.ne.s32.totalorder %s176, %s179
      %p185 = scmp.eq.s32.totalorder %s20, 0
      %p186 = por %p184, %p185
      %p187 = scmp.ne.s32.totalorder %s176, %s179
      %p188 = scmp.eq.s32.totalorder %s25, 1
      %p189 = por %p187, %p188
      %p190 = scmp.ne.s32.totalorder %s179, %s180
      %p191 = scmp.eq.s32.totalorder %s25, 0
      %p192 = por %p190, %p191
      %p193 = scmp.ne.s32.totalorder %s179, %s180
      %p194 = scmp.eq.s32.totalorder %s26, 1
      %p195 = por %p193, %p194
      %p197 = scmp.ne.s32.totalorder %s180, %s196
      %p198 = scmp.eq.s32.totalorder %s26, 0
      %p199 = por %p197, %p198
      %s200 = ssub.s32 %s20, %s27
      %p201 = scmp.eq.s32.totalorder %s200, 0
      %s203 = sadd.s32 %s202, 1
      %s204 = scalar_select %p201, %s202, %s203
      %p207 = pneg %p201
      %p208 = scmp.eq.s32.totalorder %s20, 1
      %p209 = por %p207, %p208
      %p210 = scmp.ne.s32.totalorder %s202, %s205
      %p211 = scmp.eq.s32.totalorder %s20, 0
      %p212 = por %p210, %p211
      %p213 = scmp.ne.s32.totalorder %s202, %s205
      %p214 = scmp.eq.s32.totalorder %s25, 1
      %p215 = por %p213, %p214
      %p216 = scmp.ne.s32.totalorder %s205, %s206
      %p217 = scmp.eq.s32.totalorder %s25, 0
      %p218 = por %p216, %p217
      %p219 = scmp.ne.s32.totalorder %s205, %s206
      %p220 = scmp.eq.s32.totalorder %s26, 1
      %p221 = por %p219, %p220
      %p223 = scmp.ne.s32.totalorder %s206, %s222
      %p224 = scmp.eq.s32.totalorder %s26, 0
      %p225 = por %p223, %p224
      %p226 = scmp.le.s32.totalorder 1, %s20
      %p227 = scmp.lt.s32.totalorder %s20, 3
      %p228 = pnand %p226, %p227
      %p229 = pneg %p228
      // Predicated region
      $region9: #{tpu_custom_call.1} parent=5 // pred_check
        _
      $region10: #{tpu_custom_call.1} parent=5 // pred_check_branch
        %231 = sbr.rel (%p228) target = $region12
      $region11: #{tpu_custom_call.1} parent=5 // pred_region
        %s232 = ssub.s32 %s20, 1
        // Predicated region
        $region13: #{tpu_custom_call.1} parent=11 // pred_check
          %p233 = pneg %p119
        $region14: #{tpu_custom_call.1} parent=11 // pred_check_branch
          %235 = sbr.rel (%p233) target = $region16
        $region15: #{tpu_custom_call.1} parent=11 // pred_region
          _
        $region16: #{tpu_custom_call.1} parent=11 // pred_fallthru
          _
        // Predicated region
        $region17: #{tpu_custom_call.1} parent=11 // pred_check
          %p236 = pneg %p140
        $region18: #{tpu_custom_call.1} parent=11 // pred_check_branch
          %238 = sbr.rel (%p236) target = $region20
        $region19: #{tpu_custom_call.1} parent=11 // pred_region
          _
        $region20: #{tpu_custom_call.1} parent=11 // pred_fallthru
          _
      $region12: #{tpu_custom_call.1} parent=5 // pred_fallthru
        _
      %p239 = scmp.lt.s32.totalorder %s20, 2
      // Predicated region
      $region21: #{tpu_custom_call.1} parent=5 // pred_check
        %p240 = pneg %p239
      $region22: #{tpu_custom_call.1} parent=5 // pred_check_branch
        %242 = sbr.rel (%p240) target = $region24
      $region23: #{tpu_custom_call.1} parent=5 // pred_region
        // Predicated region
        $region25: #{tpu_custom_call.1} parent=23 // pred_check
          %p243 = pneg %p40
        $region26: #{tpu_custom_call.1} parent=23 // pred_check_branch
          %245 = sbr.rel (%p243) target = $region28
        $region27: #{tpu_custom_call.1} parent=23 // pred_region
          %s246 = smul.u32 16, %s20
          %p247 = scmp.lt.s32.totalorder %s246, 31
          %s248 = scalar_select %p247, %s246, 31
          %s249 = smul.addr %s248, 8
          %s250 = scalar_lea.vmem %s0, %s249
          %s251 = smul.u32 16, %s20
        $region28: #{tpu_custom_call.1} parent=23 // pred_fallthru
          _
        // Predicated region
        $region29: #{tpu_custom_call.1} parent=23 // pred_check
          %p252 = pneg %p66
        $region30: #{tpu_custom_call.1} parent=23 // pred_check_branch
          %254 = sbr.rel (%p252) target = $region32
        $region31: #{tpu_custom_call.1} parent=23 // pred_region
          %s255 = smul.u32 16, %s20
          %p256 = scmp.lt.s32.totalorder %s255, 31
          %s257 = scalar_select %p256, %s255, 31
          %s258 = smul.addr %s257, 8
          %s259 = scalar_lea.vmem %s1, %s258
          %s260 = smul.u32 16, %s20
        $region32: #{tpu_custom_call.1} parent=23 // pred_fallthru
          _
        // Predicated region
        $region33: #{tpu_custom_call.1} parent=23 // pred_check
          %p261 = pneg %p92
        $region34: #{tpu_custom_call.1} parent=23 // pred_check_branch
          %263 = sbr.rel (%p261) target = $region36
        $region35: #{tpu_custom_call.1} parent=23 // pred_region
          %s264 = smul.u32 16, %s20
          %p265 = scmp.lt.s32.totalorder %s264, 31
          %s266 = scalar_select %p265, %s264, 31
          %s267 = smul.addr %s266, 8
          %s268 = scalar_lea.vmem %s2, %s267
          %s269 = smul.u32 16, %s20
        $region36: #{tpu_custom_call.1} parent=23 // pred_fallthru
          _
        // Predicated region
        $region37: #{tpu_custom_call.1} parent=23 // pred_check
          %p270 = pneg %p160
        $region38: #{tpu_custom_call.1} parent=23 // pred_check_branch
          %272 = sbr.rel (%p270) target = $region40
        $region39: #{tpu_custom_call.1} parent=23 // pred_region
          %s273 = smul.u32 16, %s20
          %p274 = scmp.lt.s32.totalorder %s273, 31
          %s275 = scalar_select %p274, %s273, 31
          %s276 = smul.addr %s275, 8
          %s277 = scalar_lea.vmem %s5, %s276
          %s278 = smul.u32 16, %s20
        $region40: #{tpu_custom_call.1} parent=23 // pred_fallthru
          _
      $region24: #{tpu_custom_call.1} parent=5 // pred_fallthru
        _
      %p279 = scmp.le.s32.totalorder 1, %s20
      %p280 = scmp.lt.s32.totalorder %s20, 3
      %p281 = pnand %p279, %p280
      %p282 = pneg %p281
      // Predicated region
      $region41: #{tpu_custom_call.1} parent=5 // pred_check
        _
      $region42: #{tpu_custom_call.1} parent=5 // pred_check_branch
        %284 = sbr.rel (%p281) target = $region44
      $region43: #{tpu_custom_call.1} parent=5 // pred_region
        %s285 = ssub.s32 %s20, 1
        %s286 = smul.u32 16, %s25
        %p287 = scmp.lt.s32.totalorder %s286, 31
        %s288 = scalar_select %p287, %s286, 31
        %s289 = smul.addr %s288, 8
        %s290 = scalar_lea.vmem %s0, %s289
        %p291 = pneg %p46
        %p292 = pneg %p43
        %s293 = smul.u32 16, %s25
        %p294 = scmp.lt.s32.totalorder %s293, 31
        %s295 = scalar_select %p294, %s293, 31
        %s296 = smul.addr %s295, 8
        %s297 = scalar_lea.vmem %s1, %s296
        %p298 = pneg %p72
        %p299 = pneg %p69
        %s300 = smul.u32 16, %s25
        %p301 = scmp.lt.s32.totalorder %s300, 31
        %s302 = scalar_select %p301, %s300, 31
        %s303 = smul.addr %s302, 8
        %s304 = scalar_lea.vmem %s2, %s303
        %p305 = pneg %p98
        %p306 = pneg %p95
        %p307 = pneg %p119
        %p308 = pneg %p116
        %p309 = pneg %p140
        %p310 = pneg %p137
        %s311 = smul.u32 16, %s25
        %p312 = scmp.lt.s32.totalorder %s311, 31
        %s313 = scalar_select %p312, %s311, 31
        %s314 = smul.addr %s313, 8
        %s315 = scalar_lea.vmem %s5, %s314
        %p316 = pneg %p166
        %p317 = pneg %p163
        %p318 = pneg %p192
        %p319 = pneg %p189
        %s320 = sand.u32 %s179, 1
        %s321 = scalar_lea.sflag [#allocation3], %s320
        %s322 = sand.u32 %s179, 1
        %s323 = smul.addr %s322, 128
        %s324 = scalar_lea.vmem [#allocation2], %s323
        %p325 = pneg %p218
        %p326 = pneg %p215
        %s327 = sand.u32 %s205, 1
        %s328 = scalar_lea.sflag [#allocation5], %s327
        %s329 = sand.u32 %s205, 1
        %s330 = smul.addr %s329, 8
        %s331 = scalar_lea.vmem [#allocation4], %s330
        %s332 = smul.u32 16, %s25
        %p333 = scmp.lt.s32.totalorder %s332, 31
        %s334 = scalar_select %p333, %s332, 31
        %s335 = smul.addr %s334, 8
        %s336 = scalar_lea.vmem %s0, %s335
        %s337 = smul.u32 16, %s25
        %s338 = smul.u32 16, %s25
        %p339 = scmp.lt.s32.totalorder %s338, 31
        %s340 = scalar_select %p339, %s338, 31
        %s341 = smul.addr %s340, 8
        %s342 = scalar_lea.vmem %s1, %s341
        %s343 = smul.u32 16, %s25
        %s344 = smul.u32 16, %s25
        %p345 = scmp.lt.s32.totalorder %s344, 31
        %s346 = scalar_select %p345, %s344, 31
        %s347 = smul.addr %s346, 8
        %s348 = scalar_lea.vmem %s2, %s347
        %s349 = smul.u32 16, %s25
        %s350 = smul.u32 16, %s25
        %p351 = scmp.lt.s32.totalorder %s350, 31
        %s352 = scalar_select %p351, %s350, 31
        %s353 = smul.addr %s352, 8
        %s354 = scalar_lea.vmem %s5, %s353
        %s355 = smul.u32 16, %s25
        %s356 = smul.u32 16, %s25
        %v357 = vld [vmem:[%s336] sm:$0xff]
        %v358 = vld [vmem:[%s336 + $0x8] sm:$0xff]
        %v359 = vld [vmem:[%s336 + $0x10] sm:$0xff]
        %v360 = vld [vmem:[%s336 + $0x18] sm:$0xff]
        %v361 = vld [vmem:[%s336 + $0x20] sm:$0xff]
        %v362 = vld [vmem:[%s336 + $0x28] sm:$0xff]
        %v363 = vld [vmem:[%s336 + $0x30] sm:$0xff]
        %v364 = vld [vmem:[%s336 + $0x38] sm:$0xff]
        %v365 = vld [vmem:[%s336 + $0x40] sm:$0xff]
        %v366 = vld [vmem:[%s336 + $0x48] sm:$0xff]
        %v367 = vld [vmem:[%s336 + $0x50] sm:$0xff]
        %v368 = vld [vmem:[%s336 + $0x58] sm:$0xff]
        %v369 = vld [vmem:[%s336 + $0x60] sm:$0xff]
        %v370 = vld [vmem:[%s336 + $0x68] sm:$0xff]
        %v371 = vld [vmem:[%s336 + $0x70] sm:$0xff]
        %v372 = vld [vmem:[%s336 + $0x78] sm:$0xff]
        %v373 = vld [vmem:[%s3] sm:$0xff]
        %v374 = vld [vmem:[%s3 + $0x8] sm:$0xff]
        %v375 = vld [vmem:[%s3 + $0x10] sm:$0xff]
        %v376 = vld [vmem:[%s3 + $0x18] sm:$0xff]
        %v377 = vld [vmem:[%s342] sm:$0xff]
        %v378 = vld [vmem:[%s342 + $0x8] sm:$0xff]
        %v379 = vld [vmem:[%s342 + $0x10] sm:$0xff]
        %v380 = vld [vmem:[%s342 + $0x18] sm:$0xff]
        %v381 = vld [vmem:[%s342 + $0x20] sm:$0xff]
        %v382 = vld [vmem:[%s342 + $0x28] sm:$0xff]
        %v383 = vld [vmem:[%s342 + $0x30] sm:$0xff]
        %v384 = vld [vmem:[%s342 + $0x38] sm:$0xff]
        %v385 = vld [vmem:[%s342 + $0x40] sm:$0xff]
        %v386 = vld [vmem:[%s342 + $0x48] sm:$0xff]
        %v387 = vld [vmem:[%s342 + $0x50] sm:$0xff]
        %v388 = vld [vmem:[%s342 + $0x58] sm:$0xff]
        %v389 = vld [vmem:[%s342 + $0x60] sm:$0xff]
        %v390 = vld [vmem:[%s342 + $0x68] sm:$0xff]
        %v391 = vld [vmem:[%s342 + $0x70] sm:$0xff]
        %v392 = vld [vmem:[%s342 + $0x78] sm:$0xff]
        %v393 = vld [vmem:[%s3 + $0x20] sm:$0xff]
        %v394 = vld [vmem:[%s3 + $0x28] sm:$0xff]
        %v395 = vld [vmem:[%s3 + $0x30] sm:$0xff]
        %v396 = vld [vmem:[%s3 + $0x38] sm:$0xff]
        %vm397 = vcmask 261120
        %v399 = vsel %vm397, %v377, 0
        %v402 = vsel %vm397, %v378, 0
        %v405 = vsel %vm397, %v379, 0
        %v408 = vsel %vm397, %v380, 0
        %v411 = vsel %vm397, %v381, 0
        %v414 = vsel %vm397, %v382, 0
        %v417 = vsel %vm397, %v383, 0
        %v420 = vsel %vm397, %v384, 0
        %v423 = vsel %vm397, %v385, 0
        %v426 = vsel %vm397, %v386, 0
        %v429 = vsel %vm397, %v387, 0
        %v432 = vsel %vm397, %v388, 0
        %v435 = vsel %vm397, %v389, 0
        %v438 = vsel %vm397, %v390, 0
        %v441 = vsel %vm397, %v391, 0
        %v444 = vsel %vm397, %v392, 0
        %446 = vmatprep.subr.mxu0 0.0
        %447 = vmatpush1.msra.mxu0 %v393
        %448 = vmatprep.subr.mxu0 0.0
        %449 = vmatpush1.msra.mxu0 %v394
        %450 = vmatprep.subr.mxu0 0.0
        %451 = vmatpush1.msra.mxu0 %v395
        %452 = vmatprep.subr.mxu0 0.0
        %453 = vmatpush1.msra.mxu0 %v396
        %454 = vmatprep.subr.mxu0 0.0
        %455 = vmatpush1.msra.mxu0 0.0
        %456 = vmatprep.subr.mxu0 0.0
        %457 = vmatpush1.msra.mxu0 0.0
        %458 = vmatprep.subr.mxu0 0.0
        %459 = vmatpush1.msra.mxu0 0.0
        %460 = vmatprep.subr.mxu0 0.0
        %461 = vmatpush1.msra.mxu0 0.0
        %462 = vmatprep.subr.mxu0 0.0
        %463 = vmatpush1.msra.mxu0 0.0
        %464 = vmatprep.subr.mxu0 0.0
        %465 = vmatpush1.msra.mxu0 0.0
        %466 = vmatprep.subr.mxu0 0.0
        %467 = vmatpush1.msra.mxu0 0.0
        %468 = vmatprep.subr.mxu0 0.0
        %469 = vmatpush1.msra.mxu0 0.0
        %470 = vmatprep.subr.mxu0 0.0
        %471 = vmatpush1.msra.mxu0 0.0
        %472 = vmatprep.subr.mxu0 0.0
        %473 = vmatpush1.msra.mxu0 0.0
        %474 = vmatprep.subr.mxu0 0.0
        %475 = vmatpush1.msra.mxu0 0.0
        %476 = vmatprep.subr.mxu0 0.0
        %477 = vmatpush1.msra.mxu0 0.0
        %478 = vmatprep.subr.mxu0 0.0
        %479 = vmatpush1.msra.mxu0 0.0
        %480 = vmatprep.subr.mxu0 0.0
        %481 = vmatpush1.msra.mxu0 0.0
        %482 = vmatprep.subr.mxu0 0.0
        %483 = vmatpush1.msra.mxu0 0.0
        %484 = vmatprep.subr.mxu0 0.0
        %485 = vmatpush1.msra.mxu0 0.0
        %486 = vmatprep.subr.mxu0 0.0
        %487 = vmatpush1.msra.mxu0 0.0
        %488 = vmatprep.subr.mxu0 0.0
        %489 = vmatpush1.msra.mxu0 0.0
        %490 = vmatprep.subr.mxu0 0.0
        %491 = vmatpush1.msra.mxu0 0.0
        %492 = vmatprep.subr.mxu0 0.0
        %493 = vmatpush1.msra.mxu0 0.0
        %494 = vmatprep.subr.mxu0 0.0
        %495 = vmatpush1.msra.mxu0 0.0
        %496 = vmatprep.subr.mxu0 0.0
        %497 = vmatpush1.msra.mxu0 0.0
        %498 = vmatprep.subr.mxu0 0.0
        %499 = vmatpush1.msra.mxu0 0.0
        %500 = vmatprep.subr.mxu0 0.0
        %501 = vmatpush1.msra.mxu0 0.0
        %502 = vmatprep.subr.mxu0 0.0
        %503 = vmatpush1.msra.mxu0 0.0
        %504 = vmatprep.subr.mxu0 0.0
        %505 = vmatpush1.msra.mxu0 0.0
        %506 = vmatprep.subr.mxu0 0.0
        %507 = vmatpush1.msra.mxu0 0.0
        %508 = vmatprep.subr.mxu0 0.0
        %509 = vmatpush1.msra.mxu0 0.0
        %510 = vmatprep.mubr.f32.mxu0 0.0
        %511 = vmatmul.mubr.f32.gmra.mrb[0].mxu0 %v399
        %v512 = vpop.f32.mrb[0].mxu0
        %v513 = vadd.f32 0.0, %v512
        %v514 = vpop.f32.mrb[0].mxu0
        %515 = vmatprep.mubr.f32.mxu0 0.0
        %516 = vmatmul.mubr.f32.gmra.mrb[0].mxu0 %v402
        %v517 = vpop.f32.mrb[0].mxu0
        %v518 = vadd.f32 0.0, %v517
        %v519 = vpop.f32.mrb[0].mxu0
        %520 = vmatprep.mubr.f32.mxu0 0.0
        %521 = vmatmul.mubr.f32.gmra.mrb[0].mxu0 %v405
        %v522 = vpop.f32.mrb[0].mxu0
        %v523 = vadd.f32 0.0, %v522
        %v524 = vpop.f32.mrb[0].mxu0
        %525 = vmatprep.mubr.f32.mxu0 0.0
        %526 = vmatmul.mubr.f32.gmra.mrb[0].mxu0 %v408
        %v527 = vpop.f32.mrb[0].mxu0
        %v528 = vadd.f32 0.0, %v527
        %v529 = vpop.f32.mrb[0].mxu0
        %530 = vmatprep.mubr.f32.mxu0 0.0
        %531 = vmatmul.mubr.f32.gmra.mrb[0].mxu0 %v411
        %v532 = vpop.f32.mrb[0].mxu0
        %v533 = vadd.f32 0.0, %v532
        %v534 = vpop.f32.mrb[0].mxu0
        %535 = vmatprep.mubr.f32.mxu0 0.0
        %536 = vmatmul.mubr.f32.gmra.mrb[0].mxu0 %v414
        %v537 = vpop.f32.mrb[0].mxu0
        %v538 = vadd.f32 0.0, %v537
        %v539 = vpop.f32.mrb[0].mxu0
        %540 = vmatprep.mubr.f32.mxu0 0.0
        %541 = vmatmul.mubr.f32.gmra.mrb[0].mxu0 %v417
        %v542 = vpop.f32.mrb[0].mxu0
        %v543 = vadd.f32 0.0, %v542
        %v544 = vpop.f32.mrb[0].mxu0
        %545 = vmatprep.mubr.f32.mxu0 0.0
        %546 = vmatmul.mubr.f32.gmra.mrb[0].mxu0 %v420
        %v547 = vpop.f32.mrb[0].mxu0
        %v548 = vadd.f32 0.0, %v547
        %v549 = vpop.f32.mrb[0].mxu0
        %550 = vmatprep.mubr.f32.mxu0 0.0
        %551 = vmatmul.mubr.f32.gmra.mrb[0].mxu0 %v423
        %v552 = vpop.f32.mrb[0].mxu0
        %v553 = vadd.f32 0.0, %v552
        %v554 = vpop.f32.mrb[0].mxu0
        %555 = vmatprep.mubr.f32.mxu0 0.0
        %556 = vmatmul.mubr.f32.gmra.mrb[0].mxu0 %v426
        %v557 = vpop.f32.mrb[0].mxu0
        %v558 = vadd.f32 0.0, %v557
        %v559 = vpop.f32.mrb[0].mxu0
        %560 = vmatprep.mubr.f32.mxu0 0.0
        %561 = vmatmul.mubr.f32.gmra.mrb[0].mxu0 %v429
        %v562 = vpop.f32.mrb[0].mxu0
        %v563 = vadd.f32 0.0, %v562
        %v564 = vpop.f32.mrb[0].mxu0
        %565 = vmatprep.mubr.f32.mxu0 0.0
        %566 = vmatmul.mubr.f32.gmra.mrb[0].mxu0 %v432
        %v567 = vpop.f32.mrb[0].mxu0
        %v568 = vadd.f32 0.0, %v567
        %v569 = vpop.f32.mrb[0].mxu0
        %570 = vmatprep.mubr.f32.mxu0 0.0
        %571 = vmatmul.mubr.f32.gmra.mrb[0].mxu0 %v435
        %v572 = vpop.f32.mrb[0].mxu0
        %v573 = vadd.f32 0.0, %v572
        %v574 = vpop.f32.mrb[0].mxu0
        %575 = vmatprep.mubr.f32.mxu0 0.0
        %576 = vmatmul.mubr.f32.gmra.mrb[0].mxu0 %v438
        %v577 = vpop.f32.mrb[0].mxu0
        %v578 = vadd.f32 0.0, %v577
        %v579 = vpop.f32.mrb[0].mxu0
        %580 = vmatprep.mubr.f32.mxu0 0.0
        %581 = vmatmul.mubr.f32.gmra.mrb[0].mxu0 %v441
        %v582 = vpop.f32.mrb[0].mxu0
        %v583 = vadd.f32 0.0, %v582
        %v584 = vpop.f32.mrb[0].mxu0
        %585 = vmatprep.mubr.f32.mxu0 0.0
        %586 = vmatmul.mubr.f32.gmra.mrb[0].mxu0 %v444
        %v587 = vpop.f32.mrb[0].mxu0
        %v588 = vadd.f32 0.0, %v587
        %v589 = vpop.f32.mrb[0].mxu0
        %590 = vdwg.mxu0
        %v592 = vsel %vm397, %v357, 0
        %v595 = vsel %vm397, %v358, 0
        %v598 = vsel %vm397, %v359, 0
        %v601 = vsel %vm397, %v360, 0
        %v604 = vsel %vm397, %v361, 0
        %v607 = vsel %vm397, %v362, 0
        %v610 = vsel %vm397, %v363, 0
        %v613 = vsel %vm397, %v364, 0
        %v616 = vsel %vm397, %v365, 0
        %v619 = vsel %vm397, %v366, 0
        %v622 = vsel %vm397, %v367, 0
        %v625 = vsel %vm397, %v368, 0
        %v628 = vsel %vm397, %v369, 0
        %v631 = vsel %vm397, %v370, 0
        %v634 = vsel %vm397, %v371, 0
        %v637 = vsel %vm397, %v372, 0
        %639 = vmatprep.subr.mxu0 0.0
        %640 = vmatpush1.msra.mxu0 %v373
        %641 = vmatprep.subr.mxu0 0.0
        %642 = vmatpush1.msra.mxu0 %v374
        %643 = vmatprep.subr.mxu0 0.0
        %644 = vmatpush1.msra.mxu0 %v375
        %645 = vmatprep.subr.mxu0 0.0
        %646 = vmatpush1.msra.mxu0 %v376
        %647 = vmatprep.subr.mxu0 0.0
        %648 = vmatpush1.msra.mxu0 0.0
        %649 = vmatprep.subr.mxu0 0.0
        %650 = vmatpush1.msra.mxu0 0.0
        %651 = vmatprep.subr.mxu0 0.0
        %652 = vmatpush1.msra.mxu0 0.0
        %653 = vmatprep.subr.mxu0 0.0
        %654 = vmatpush1.msra.mxu0 0.0
        %655 = vmatprep.subr.mxu0 0.0
        %656 = vmatpush1.msra.mxu0 0.0
        %657 = vmatprep.subr.mxu0 0.0
        %658 = vmatpush1.msra.mxu0 0.0
        %659 = vmatprep.subr.mxu0 0.0
        %660 = vmatpush1.msra.mxu0 0.0
        %661 = vmatprep.subr.mxu0 0.0
        %662 = vmatpush1.msra.mxu0 0.0
        %663 = vmatprep.subr.mxu0 0.0
        %664 = vmatpush1.msra.mxu0 0.0
        %665 = vmatprep.subr.mxu0 0.0
        %666 = vmatpush1.msra.mxu0 0.0
        %667 = vmatprep.subr.mxu0 0.0
        %668 = vmatpush1.msra.mxu0 0.0
        %669 = vmatprep.subr.mxu0 0.0
        %670 = vmatpush1.msra.mxu0 0.0
        %671 = vmatprep.subr.mxu0 0.0
        %672 = vmatpush1.msra.mxu0 0.0
        %673 = vmatprep.subr.mxu0 0.0
        %674 = vmatpush1.msra.mxu0 0.0
        %675 = vmatprep.subr.mxu0 0.0
        %676 = vmatpush1.msra.mxu0 0.0
        %677 = vmatprep.subr.mxu0 0.0
        %678 = vmatpush1.msra.mxu0 0.0
        %679 = vmatprep.subr.mxu0 0.0
        %680 = vmatpush1.msra.mxu0 0.0
        %681 = vmatprep.subr.mxu0 0.0
        %682 = vmatpush1.msra.mxu0 0.0
        %683 = vmatprep.subr.mxu0 0.0
        %684 = vmatpush1.msra.mxu0 0.0
        %685 = vmatprep.subr.mxu0 0.0
        %686 = vmatpush1.msra.mxu0 0.0
        %687 = vmatprep.subr.mxu0 0.0
        %688 = vmatpush1.msra.mxu0 0.0
        %689 = vmatprep.subr.mxu0 0.0
        %690 = vmatpush1.msra.mxu0 0.0
        %691 = vmatprep.subr.mxu0 0.0
        %692 = vmatpush1.msra.mxu0 0.0
        %693 = vmatprep.subr.mxu0 0.0
        %694 = vmatpush1.msra.mxu0 0.0
        %695 = vmatprep.subr.mxu0 0.0
        %696 = vmatpush1.msra.mxu0 0.0
        %697 = vmatprep.subr.mxu0 0.0
        %698 = vmatpush1.msra.mxu0 0.0
        %699 = vmatprep.subr.mxu0 0.0
        %700 = vmatpush1.msra.mxu0 0.0
        %701 = vmatprep.subr.mxu0 0.0
        %702 = vmatpush1.msra.mxu0 0.0
        %703 = vmatprep.mubr.f32.mxu0 0.0
        %704 = vmatmul.mubr.f32.gmra.mrb[0].mxu0 %v592
        %v705 = vpop.f32.mrb[0].mxu0
        %v706 = vadd.f32 %v513, %v705
        %v707 = vpop.f32.mrb[0].mxu0
        %708 = vmatprep.mubr.f32.mxu0 0.0
        %709 = vmatmul.mubr.f32.gmra.mrb[0].mxu0 %v595
        %v710 = vpop.f32.mrb[0].mxu0
        %v711 = vadd.f32 %v518, %v710
        %v712 = vpop.f32.mrb[0].mxu0
        %713 = vmatprep.mubr.f32.mxu0 0.0
        %714 = vmatmul.mubr.f32.gmra.mrb[0].mxu0 %v598
        %v715 = vpop.f32.mrb[0].mxu0
        %v716 = vadd.f32 %v523, %v715
        %v717 = vpop.f32.mrb[0].mxu0
        %718 = vmatprep.mubr.f32.mxu0 0.0
        %719 = vmatmul.mubr.f32.gmra.mrb[0].mxu0 %v601
        %v720 = vpop.f32.mrb[0].mxu0
        %v721 = vadd.f32 %v528, %v720
        %v722 = vpop.f32.mrb[0].mxu0
        %723 = vmatprep.mubr.f32.mxu0 0.0
        %724 = vmatmul.mubr.f32.gmra.mrb[0].mxu0 %v604
        %v725 = vpop.f32.mrb[0].mxu0
        %v726 = vadd.f32 %v533, %v725
        %v727 = vpop.f32.mrb[0].mxu0
        %728 = vmatprep.mubr.f32.mxu0 0.0
        %729 = vmatmul.mubr.f32.gmra.mrb[0].mxu0 %v607
        %v730 = vpop.f32.mrb[0].mxu0
        %v731 = vadd.f32 %v538, %v730
        %v732 = vpop.f32.mrb[0].mxu0
        %733 = vmatprep.mubr.f32.mxu0 0.0
        %734 = vmatmul.mubr.f32.gmra.mrb[0].mxu0 %v610
        %v735 = vpop.f32.mrb[0].mxu0
        %v736 = vadd.f32 %v543, %v735
        %v737 = vpop.f32.mrb[0].mxu0
        %738 = vmatprep.mubr.f32.mxu0 0.0
        %739 = vmatmul.mubr.f32.gmra.mrb[0].mxu0 %v613
        %v740 = vpop.f32.mrb[0].mxu0
        %v741 = vadd.f32 %v548, %v740
        %v742 = vpop.f32.mrb[0].mxu0
        %743 = vmatprep.mubr.f32.mxu0 0.0
        %744 = vmatmul.mubr.f32.gmra.mrb[0].mxu0 %v616
        %v745 = vpop.f32.mrb[0].mxu0
        %v746 = vadd.f32 %v553, %v745
        %v747 = vpop.f32.mrb[0].mxu0
        %748 = vmatprep.mubr.f32.mxu0 0.0
        %749 = vmatmul.mubr.f32.gmra.mrb[0].mxu0 %v619
        %v750 = vpop.f32.mrb[0].mxu0
        %v751 = vadd.f32 %v558, %v750
        %v752 = vpop.f32.mrb[0].mxu0
        %753 = vmatprep.mubr.f32.mxu0 0.0
        %754 = vmatmul.mubr.f32.gmra.mrb[0].mxu0 %v622
        %v755 = vpop.f32.mrb[0].mxu0
        %v756 = vadd.f32 %v563, %v755
        %v757 = vpop.f32.mrb[0].mxu0
        %758 = vmatprep.mubr.f32.mxu0 0.0
        %759 = vmatmul.mubr.f32.gmra.mrb[0].mxu0 %v625
        %v760 = vpop.f32.mrb[0].mxu0
        %v761 = vadd.f32 %v568, %v760
        %v762 = vpop.f32.mrb[0].mxu0
        %763 = vmatprep.mubr.f32.mxu0 0.0
        %764 = vmatmul.mubr.f32.gmra.mrb[0].mxu0 %v628
        %v765 = vpop.f32.mrb[0].mxu0
        %v766 = vadd.f32 %v573, %v765
        %v767 = vpop.f32.mrb[0].mxu0
        %768 = vmatprep.mubr.f32.mxu0 0.0
        %769 = vmatmul.mubr.f32.gmra.mrb[0].mxu0 %v631
        %v770 = vpop.f32.mrb[0].mxu0
        %v771 = vadd.f32 %v578, %v770
        %v772 = vpop.f32.mrb[0].mxu0
        %773 = vmatprep.mubr.f32.mxu0 0.0
        %774 = vmatmul.mubr.f32.gmra.mrb[0].mxu0 %v634
        %v775 = vpop.f32.mrb[0].mxu0
        %v776 = vadd.f32 %v583, %v775
        %v777 = vpop.f32.mrb[0].mxu0
        %778 = vmatprep.mubr.f32.mxu0 0.0
        %779 = vmatmul.mubr.f32.gmra.mrb[0].mxu0 %v637
        %v780 = vpop.f32.mrb[0].mxu0
        %v781 = vadd.f32 %v588, %v780
        %v782 = vpop.f32.mrb[0].mxu0
        %783 = vdwg.mxu0
        %v784 = vld [vmem:[%s348] sm:$0xff]
        %v785 = vld [vmem:[%s348 + $0x8] sm:$0xff]
        %v786 = vld [vmem:[%s348 + $0x10] sm:$0xff]
        %v787 = vld [vmem:[%s348 + $0x18] sm:$0xff]
        %v788 = vld [vmem:[%s348 + $0x20] sm:$0xff]
        %v789 = vld [vmem:[%s348 + $0x28] sm:$0xff]
        %v790 = vld [vmem:[%s348 + $0x30] sm:$0xff]
        %v791 = vld [vmem:[%s348 + $0x38] sm:$0xff]
        %v792 = vld [vmem:[%s348 + $0x40] sm:$0xff]
        %v793 = vld [vmem:[%s348 + $0x48] sm:$0xff]
        %v794 = vld [vmem:[%s348 + $0x50] sm:$0xff]
        %v795 = vld [vmem:[%s348 + $0x58] sm:$0xff]
        %v796 = vld [vmem:[%s348 + $0x60] sm:$0xff]
        %v797 = vld [vmem:[%s348 + $0x68] sm:$0xff]
        %v798 = vld [vmem:[%s348 + $0x70] sm:$0xff]
        %v799 = vld [vmem:[%s348 + $0x78] sm:$0xff]
        %v800 = vld [vmem:[%s3 + $0x40] sm:$0xff]
        %v801 = vld [vmem:[%s3 + $0x48] sm:$0xff]
        %v802 = vld [vmem:[%s3 + $0x50] sm:$0xff]
        %v803 = vld [vmem:[%s3 + $0x58] sm:$0xff]
        %v805 = vsel %vm397, %v784, 0
        %v808 = vsel %vm397, %v785, 0
        %v811 = vsel %vm397, %v786, 0
        %v814 = vsel %vm397, %v787, 0
        %v817 = vsel %vm397, %v788, 0
        %v820 = vsel %vm397, %v789, 0
        %v823 = vsel %vm397, %v790, 0
        %v826 = vsel %vm397, %v791, 0
        %v829 = vsel %vm397, %v792, 0
        %v832 = vsel %vm397, %v793, 0
        %v835 = vsel %vm397, %v794, 0
        %v838 = vsel %vm397, %v795, 0
        %v841 = vsel %vm397, %v796, 0
        %v844 = vsel %vm397, %v797, 0
        %v847 = vsel %vm397, %v798, 0
        %v850 = vsel %vm397, %v799, 0
        %852 = vmatprep.subr.mxu0 0.0
        %853 = vmatpush1.msra.mxu0 %v800
        %854 = vmatprep.subr.mxu0 0.0
        %855 = vmatpush1.msra.mxu0 %v801
        %856 = vmatprep.subr.mxu0 0.0
        %857 = vmatpush1.msra.mxu0 %v802
        %858 = vmatprep.subr.mxu0 0.0
        %859 = vmatpush1.msra.mxu0 %v803
        %860 = vmatprep.subr.mxu0 0.0
        %861 = vmatpush1.msra.mxu0 0.0
        %862 = vmatprep.subr.mxu0 0.0
        %863 = vmatpush1.msra.mxu0 0.0
        %864 = vmatprep.subr.mxu0 0.0
        %865 = vmatpush1.msra.mxu0 0.0
        %866 = vmatprep.subr.mxu0 0.0
        %867 = vmatpush1.msra.mxu0 0.0
        %868 = vmatprep.subr.mxu0 0.0
        %869 = vmatpush1.msra.mxu0 0.0
        %870 = vmatprep.subr.mxu0 0.0
        %871 = vmatpush1.msra.mxu0 0.0
        %872 = vmatprep.subr.mxu0 0.0
        %873 = vmatpush1.msra.mxu0 0.0
        %874 = vmatprep.subr.mxu0 0.0
        %875 = vmatpush1.msra.mxu0 0.0
        %876 = vmatprep.subr.mxu0 0.0
        %877 = vmatpush1.msra.mxu0 0.0
        %878 = vmatprep.subr.mxu0 0.0
        %879 = vmatpush1.msra.mxu0 0.0
        %880 = vmatprep.subr.mxu0 0.0
        %881 = vmatpush1.msra.mxu0 0.0
        %882 = vmatprep.subr.mxu0 0.0
        %883 = vmatpush1.msra.mxu0 0.0
        %884 = vmatprep.subr.mxu0 0.0
        %885 = vmatpush1.msra.mxu0 0.0
        %886 = vmatprep.subr.mxu0 0.0
        %887 = vmatpush1.msra.mxu0 0.0
        %888 = vmatprep.subr.mxu0 0.0
        %889 = vmatpush1.msra.mxu0 0.0
        %890 = vmatprep.subr.mxu0 0.0
        %891 = vmatpush1.msra.mxu0 0.0
        %892 = vmatprep.subr.mxu0 0.0
        %893 = vmatpush1.msra.mxu0 0.0
        %894 = vmatprep.subr.mxu0 0.0
        %895 = vmatpush1.msra.mxu0 0.0
        %896 = vmatprep.subr.mxu0 0.0
        %897 = vmatpush1.msra.mxu0 0.0
        %898 = vmatprep.subr.mxu0 0.0
        %899 = vmatpush1.msra.mxu0 0.0
        %900 = vmatprep.subr.mxu0 0.0
        %901 = vmatpush1.msra.mxu0 0.0
        %902 = vmatprep.subr.mxu0 0.0
        %903 = vmatpush1.msra.mxu0 0.0
        %904 = vmatprep.subr.mxu0 0.0
        %905 = vmatpush1.msra.mxu0 0.0
        %906 = vmatprep.subr.mxu0 0.0
        %907 = vmatpush1.msra.mxu0 0.0
        %908 = vmatprep.subr.mxu0 0.0
        %909 = vmatpush1.msra.mxu0 0.0
        %910 = vmatprep.subr.mxu0 0.0
        %911 = vmatpush1.msra.mxu0 0.0
        %912 = vmatprep.subr.mxu0 0.0
        %913 = vmatpush1.msra.mxu0 0.0
        %914 = vmatprep.subr.mxu0 0.0
        %915 = vmatpush1.msra.mxu0 0.0
        %916 = vmatprep.mubr.f32.mxu0 0.0
        %917 = vmatmul.mubr.f32.gmra.mrb[0].mxu0 %v805
        %v918 = vpop.f32.mrb[0].mxu0
        %v919 = vadd.f32 0.0, %v918
        %v920 = vpop.f32.mrb[0].mxu0
        %921 = vmatprep.mubr.f32.mxu0 0.0
        %922 = vmatmul.mubr.f32.gmra.mrb[0].mxu0 %v808
        %v923 = vpop.f32.mrb[0].mxu0
        %v924 = vadd.f32 0.0, %v923
        %v925 = vpop.f32.mrb[0].mxu0
        %926 = vmatprep.mubr.f32.mxu0 0.0
        %927 = vmatmul.mubr.f32.gmra.mrb[0].mxu0 %v811
        %v928 = vpop.f32.mrb[0].mxu0
        %v929 = vadd.f32 0.0, %v928
        %v930 = vpop.f32.mrb[0].mxu0
        %931 = vmatprep.mubr.f32.mxu0 0.0
        %932 = vmatmul.mubr.f32.gmra.mrb[0].mxu0 %v814
        %v933 = vpop.f32.mrb[0].mxu0
        %v934 = vadd.f32 0.0, %v933
        %v935 = vpop.f32.mrb[0].mxu0
        %936 = vmatprep.mubr.f32.mxu0 0.0
        %937 = vmatmul.mubr.f32.gmra.mrb[0].mxu0 %v817
        %v938 = vpop.f32.mrb[0].mxu0
        %v939 = vadd.f32 0.0, %v938
        %v940 = vpop.f32.mrb[0].mxu0
        %941 = vmatprep.mubr.f32.mxu0 0.0
        %942 = vmatmul.mubr.f32.gmra.mrb[0].mxu0 %v820
        %v943 = vpop.f32.mrb[0].mxu0
        %v944 = vadd.f32 0.0, %v943
        %v945 = vpop.f32.mrb[0].mxu0
        %946 = vmatprep.mubr.f32.mxu0 0.0
        %947 = vmatmul.mubr.f32.gmra.mrb[0].mxu0 %v823
        %v948 = vpop.f32.mrb[0].mxu0
        %v949 = vadd.f32 0.0, %v948
        %v950 = vpop.f32.mrb[0].mxu0
        %951 = vmatprep.mubr.f32.mxu0 0.0
        %952 = vmatmul.mubr.f32.gmra.mrb[0].mxu0 %v826
        %v953 = vpop.f32.mrb[0].mxu0
        %v954 = vadd.f32 0.0, %v953
        %v955 = vpop.f32.mrb[0].mxu0
        %956 = vmatprep.mubr.f32.mxu0 0.0
        %957 = vmatmul.mubr.f32.gmra.mrb[0].mxu0 %v829
        %v958 = vpop.f32.mrb[0].mxu0
        %v959 = vadd.f32 0.0, %v958
        %v960 = vpop.f32.mrb[0].mxu0
        %961 = vmatprep.mubr.f32.mxu0 0.0
        %962 = vmatmul.mubr.f32.gmra.mrb[0].mxu0 %v832
        %v963 = vpop.f32.mrb[0].mxu0
        %v964 = vadd.f32 0.0, %v963
        %v965 = vpop.f32.mrb[0].mxu0
        %966 = vmatprep.mubr.f32.mxu0 0.0
        %967 = vmatmul.mubr.f32.gmra.mrb[0].mxu0 %v835
        %v968 = vpop.f32.mrb[0].mxu0
        %v969 = vadd.f32 0.0, %v968
        %v970 = vpop.f32.mrb[0].mxu0
        %971 = vmatprep.mubr.f32.mxu0 0.0
        %972 = vmatmul.mubr.f32.gmra.mrb[0].mxu0 %v838
        %v973 = vpop.f32.mrb[0].mxu0
        %v974 = vadd.f32 0.0, %v973
        %v975 = vpop.f32.mrb[0].mxu0
        %976 = vmatprep.mubr.f32.mxu0 0.0
        %977 = vmatmul.mubr.f32.gmra.mrb[0].mxu0 %v841
        %v978 = vpop.f32.mrb[0].mxu0
        %v979 = vadd.f32 0.0, %v978
        %v980 = vpop.f32.mrb[0].mxu0
        %981 = vmatprep.mubr.f32.mxu0 0.0
        %982 = vmatmul.mubr.f32.gmra.mrb[0].mxu0 %v844
        %v983 = vpop.f32.mrb[0].mxu0
        %v984 = vadd.f32 0.0, %v983
        %v985 = vpop.f32.mrb[0].mxu0
        %986 = vmatprep.mubr.f32.mxu0 0.0
        %987 = vmatmul.mubr.f32.gmra.mrb[0].mxu0 %v847
        %v988 = vpop.f32.mrb[0].mxu0
        %v989 = vadd.f32 0.0, %v988
        %v990 = vpop.f32.mrb[0].mxu0
        %991 = vmatprep.mubr.f32.mxu0 0.0
        %992 = vmatmul.mubr.f32.gmra.mrb[0].mxu0 %v850
        %v993 = vpop.f32.mrb[0].mxu0
        %v994 = vadd.f32 0.0, %v993
        %v995 = vpop.f32.mrb[0].mxu0
        %996 = vdwg.mxu0
        %v997 = vadd.f32 %v706, %v919
        %v998 = vadd.f32 %v711, %v924
        %v999 = vadd.f32 %v716, %v929
        %v1000 = vadd.f32 %v721, %v934
        %v1001 = vadd.f32 %v726, %v939
        %v1002 = vadd.f32 %v731, %v944
        %v1003 = vadd.f32 %v736, %v949
        %v1004 = vadd.f32 %v741, %v954
        %v1005 = vadd.f32 %v746, %v959
        %v1006 = vadd.f32 %v751, %v964
        %v1007 = vadd.f32 %v756, %v969
        %v1008 = vadd.f32 %v761, %v974
        %v1009 = vadd.f32 %v766, %v979
        %v1010 = vadd.f32 %v771, %v984
        %v1011 = vadd.f32 %v776, %v989
        %v1012 = vadd.f32 %v781, %v994
        %v1013 = vld [vmem:[%s4] sm:$0x1]
        %v1015 = vlaneseq
        %v1016 = vshrl.u32 %v1015, 7
        %v1017 = vsub.s32 0, %v1016
        %v1018 = vrot.slane %v1013, %v1017
        %v1020 = vadd.f32 %v997, %v1018
        %v1021 = vadd.f32 %v998, %v1018
        %v1022 = vadd.f32 %v999, %v1018
        %v1023 = vadd.f32 %v1000, %v1018
        %v1024 = vadd.f32 %v1001, %v1018
        %v1025 = vadd.f32 %v1002, %v1018
        %v1026 = vadd.f32 %v1003, %v1018
        %v1027 = vadd.f32 %v1004, %v1018
        %v1028 = vadd.f32 %v1005, %v1018
        %v1029 = vadd.f32 %v1006, %v1018
        %v1030 = vadd.f32 %v1007, %v1018
        %v1031 = vadd.f32 %v1008, %v1018
        %v1032 = vadd.f32 %v1009, %v1018
        %v1033 = vadd.f32 %v1010, %v1018
        %v1034 = vadd.f32 %v1011, %v1018
        %v1035 = vadd.f32 %v1012, %v1018
        %1036 = vst [vmem:[%s324] sm:$0xff] %v1020
        %1037 = vst [vmem:[%s324 + $0x8] sm:$0xff] %v1021
        %1038 = vst [vmem:[%s324 + $0x10] sm:$0xff] %v1022
        %1039 = vst [vmem:[%s324 + $0x18] sm:$0xff] %v1023
        %1040 = vst [vmem:[%s324 + $0x20] sm:$0xff] %v1024
        %1041 = vst [vmem:[%s324 + $0x28] sm:$0xff] %v1025
        %1042 = vst [vmem:[%s324 + $0x30] sm:$0xff] %v1026
        %1043 = vst [vmem:[%s324 + $0x38] sm:$0xff] %v1027
        %1044 = vst [vmem:[%s324 + $0x40] sm:$0xff] %v1028
        %1045 = vst [vmem:[%s324 + $0x48] sm:$0xff] %v1029
        %1046 = vst [vmem:[%s324 + $0x50] sm:$0xff] %v1030
        %1047 = vst [vmem:[%s324 + $0x58] sm:$0xff] %v1031
        %1048 = vst [vmem:[%s324 + $0x60] sm:$0xff] %v1032
        %1049 = vst [vmem:[%s324 + $0x68] sm:$0xff] %v1033
        %1050 = vst [vmem:[%s324 + $0x70] sm:$0xff] %v1034
        %1051 = vst [vmem:[%s324 + $0x78] sm:$0xff] %v1035
        %v1052 = vld [vmem:[%s354] sm:$0xff]
        %v1053 = vld [vmem:[%s354 + $0x8] sm:$0xff]
        %v1054 = vld [vmem:[%s354 + $0x10] sm:$0xff]
        %v1055 = vld [vmem:[%s354 + $0x18] sm:$0xff]
        %v1056 = vld [vmem:[%s354 + $0x20] sm:$0xff]
        %v1057 = vld [vmem:[%s354 + $0x28] sm:$0xff]
        %v1058 = vld [vmem:[%s354 + $0x30] sm:$0xff]
        %v1059 = vld [vmem:[%s354 + $0x38] sm:$0xff]
        %v1060 = vld [vmem:[%s354 + $0x40] sm:$0xff]
        %v1061 = vld [vmem:[%s354 + $0x48] sm:$0xff]
        %v1062 = vld [vmem:[%s354 + $0x50] sm:$0xff]
        %v1063 = vld [vmem:[%s354 + $0x58] sm:$0xff]
        %v1064 = vld [vmem:[%s354 + $0x60] sm:$0xff]
        %v1065 = vld [vmem:[%s354 + $0x68] sm:$0xff]
        %v1066 = vld [vmem:[%s354 + $0x70] sm:$0xff]
        %v1067 = vld [vmem:[%s354 + $0x78] sm:$0xff]
        %v1068 = vlaneseq
        %v1069 = vand.u32 %v1068, 127
        %vm1070 = vcmp.lt.s32.totalorder %v1069, 16
        %v1071 = vsel %vm1070, %v1020, -1e+30
        %v1072 = vsel %vm1070, %v1021, -1e+30
        %v1073 = vsel %vm1070, %v1022, -1e+30
        %v1074 = vsel %vm1070, %v1023, -1e+30
        %v1075 = vsel %vm1070, %v1024, -1e+30
        %v1076 = vsel %vm1070, %v1025, -1e+30
        %v1077 = vsel %vm1070, %v1026, -1e+30
        %v1078 = vsel %vm1070, %v1027, -1e+30
        %v1079 = vsel %vm1070, %v1028, -1e+30
        %v1080 = vsel %vm1070, %v1029, -1e+30
        %v1081 = vsel %vm1070, %v1030, -1e+30
        %v1082 = vsel %vm1070, %v1031, -1e+30
        %v1083 = vsel %vm1070, %v1032, -1e+30
        %v1084 = vsel %vm1070, %v1033, -1e+30
        %v1085 = vsel %vm1070, %v1034, -1e+30
        %v1086 = vsel %vm1070, %v1035, -1e+30
        %1087 = vmax.xlane.f32.xlu0 %v1071
        %v1088 = vpop.xlane.xlu0 %1087
        %1089 = vmax.xlane.f32.xlu0 %v1072
        %v1090 = vpop.xlane.xlu0 %1089
        %1091 = vmax.xlane.f32.xlu0 %v1073
        %v1092 = vpop.xlane.xlu0 %1091
        %1093 = vmax.xlane.f32.xlu0 %v1074
        %v1094 = vpop.xlane.xlu0 %1093
        %1095 = vmax.xlane.f32.xlu0 %v1075
        %v1096 = vpop.xlane.xlu0 %1095
        %1097 = vmax.xlane.f32.xlu0 %v1076
        %v1098 = vpop.xlane.xlu0 %1097
        %1099 = vmax.xlane.f32.xlu0 %v1077
        %v1100 = vpop.xlane.xlu0 %1099
        %1101 = vmax.xlane.f32.xlu0 %v1078
        %v1102 = vpop.xlane.xlu0 %1101
        %1103 = vmax.xlane.f32.xlu0 %v1079
        %v1104 = vpop.xlane.xlu0 %1103
        %1105 = vmax.xlane.f32.xlu0 %v1080
        %v1106 = vpop.xlane.xlu0 %1105
        %1107 = vmax.xlane.f32.xlu0 %v1081
        %v1108 = vpop.xlane.xlu0 %1107
        %1109 = vmax.xlane.f32.xlu0 %v1082
        %v1110 = vpop.xlane.xlu0 %1109
        %1111 = vmax.xlane.f32.xlu0 %v1083
        %v1112 = vpop.xlane.xlu0 %1111
        %1113 = vmax.xlane.f32.xlu0 %v1084
        %v1114 = vpop.xlane.xlu0 %1113
        %1115 = vmax.xlane.f32.xlu0 %v1085
        %v1116 = vpop.xlane.xlu0 %1115
        %1117 = vmax.xlane.f32.xlu0 %v1086
        %v1118 = vpop.xlane.xlu0 %1117
        %v1119 = vsub.f32 %v1071, %v1088
        %v1120 = vsub.f32 %v1072, %v1090
        %v1121 = vsub.f32 %v1073, %v1092
        %v1122 = vsub.f32 %v1074, %v1094
        %v1123 = vsub.f32 %v1075, %v1096
        %v1124 = vsub.f32 %v1076, %v1098
        %v1125 = vsub.f32 %v1077, %v1100
        %v1126 = vsub.f32 %v1078, %v1102
        %v1127 = vsub.f32 %v1079, %v1104
        %v1128 = vsub.f32 %v1080, %v1106
        %v1129 = vsub.f32 %v1081, %v1108
        %v1130 = vsub.f32 %v1082, %v1110
        %v1131 = vsub.f32 %v1083, %v1112
        %v1132 = vsub.f32 %v1084, %v1114
        %v1133 = vsub.f32 %v1085, %v1116
        %v1134 = vsub.f32 %v1086, %v1118
        %v1135 = vmul.f32 %v1119, 1.442695
        %v1136 = vpow.pop %v1135
        %v1137 = vmul.f32 %v1120, 1.442695
        %v1138 = vpow.pop %v1137
        %v1139 = vmul.f32 %v1121, 1.442695
        %v1140 = vpow.pop %v1139
        %v1141 = vmul.f32 %v1122, 1.442695
        %v1142 = vpow.pop %v1141
        %v1143 = vmul.f32 %v1123, 1.442695
        %v1144 = vpow.pop %v1143
        %v1145 = vmul.f32 %v1124, 1.442695
        %v1146 = vpow.pop %v1145
        %v1147 = vmul.f32 %v1125, 1.442695
        %v1148 = vpow.pop %v1147
        %v1149 = vmul.f32 %v1126, 1.442695
        %v1150 = vpow.pop %v1149
        %v1151 = vmul.f32 %v1127, 1.442695
        %v1152 = vpow.pop %v1151
        %v1153 = vmul.f32 %v1128, 1.442695
        %v1154 = vpow.pop %v1153
        %v1155 = vmul.f32 %v1129, 1.442695
        %v1156 = vpow.pop %v1155
        %v1157 = vmul.f32 %v1130, 1.442695
        %v1158 = vpow.pop %v1157
        %v1159 = vmul.f32 %v1131, 1.442695
        %v1160 = vpow.pop %v1159
        %v1161 = vmul.f32 %v1132, 1.442695
        %v1162 = vpow.pop %v1161
        %v1163 = vmul.f32 %v1133, 1.442695
        %v1164 = vpow.pop %v1163
        %v1165 = vmul.f32 %v1134, 1.442695
        %v1166 = vpow.pop %v1165
        %1167 = vadd.xlane.f32.xlu0 %v1136
        %v1168 = vpop.xlane.xlu0 %1167
        %1169 = vadd.xlane.f32.xlu0 %v1138
        %v1170 = vpop.xlane.xlu0 %1169
        %1171 = vadd.xlane.f32.xlu0 %v1140
        %v1172 = vpop.xlane.xlu0 %1171
        %1173 = vadd.xlane.f32.xlu0 %v1142
        %v1174 = vpop.xlane.xlu0 %1173
        %1175 = vadd.xlane.f32.xlu0 %v1144
        %v1176 = vpop.xlane.xlu0 %1175
        %1177 = vadd.xlane.f32.xlu0 %v1146
        %v1178 = vpop.xlane.xlu0 %1177
        %1179 = vadd.xlane.f32.xlu0 %v1148
        %v1180 = vpop.xlane.xlu0 %1179
        %1181 = vadd.xlane.f32.xlu0 %v1150
        %v1182 = vpop.xlane.xlu0 %1181
        %1183 = vadd.xlane.f32.xlu0 %v1152
        %v1184 = vpop.xlane.xlu0 %1183
        %1185 = vadd.xlane.f32.xlu0 %v1154
        %v1186 = vpop.xlane.xlu0 %1185
        %1187 = vadd.xlane.f32.xlu0 %v1156
        %v1188 = vpop.xlane.xlu0 %1187
        %1189 = vadd.xlane.f32.xlu0 %v1158
        %v1190 = vpop.xlane.xlu0 %1189
        %1191 = vadd.xlane.f32.xlu0 %v1160
        %v1192 = vpop.xlane.xlu0 %1191
        %1193 = vadd.xlane.f32.xlu0 %v1162
        %v1194 = vpop.xlane.xlu0 %1193
        %1195 = vadd.xlane.f32.xlu0 %v1164
        %v1196 = vpop.xlane.xlu0 %1195
        %1197 = vadd.xlane.f32.xlu0 %v1166
        %v1198 = vpop.xlane.xlu0 %1197
        %v1199 = vlog2.pop %v1168
        %v1200 = vmul.f32 %v1199, 0.6931472
        %v1201 = vlog2.pop %v1170
        %v1202 = vmul.f32 %v1201, 0.6931472
        %v1203 = vlog2.pop %v1172
        %v1204 = vmul.f32 %v1203, 0.6931472
        %v1205 = vlog2.pop %v1174
        %v1206 = vmul.f32 %v1205, 0.6931472
        %v1207 = vlog2.pop %v1176
        %v1208 = vmul.f32 %v1207, 0.6931472
        %v1209 = vlog2.pop %v1178
        %v1210 = vmul.f32 %v1209, 0.6931472
        %v1211 = vlog2.pop %v1180
        %v1212 = vmul.f32 %v1211, 0.6931472
        %v1213 = vlog2.pop %v1182
        %v1214 = vmul.f32 %v1213, 0.6931472
        %v1215 = vlog2.pop %v1184
        %v1216 = vmul.f32 %v1215, 0.6931472
        %v1217 = vlog2.pop %v1186
        %v1218 = vmul.f32 %v1217, 0.6931472
        %v1219 = vlog2.pop %v1188
        %v1220 = vmul.f32 %v1219, 0.6931472
        %v1221 = vlog2.pop %v1190
        %v1222 = vmul.f32 %v1221, 0.6931472
        %v1223 = vlog2.pop %v1192
        %v1224 = vmul.f32 %v1223, 0.6931472
        %v1225 = vlog2.pop %v1194
        %v1226 = vmul.f32 %v1225, 0.6931472
        %v1227 = vlog2.pop %v1196
        %v1228 = vmul.f32 %v1227, 0.6931472
        %v1229 = vlog2.pop %v1198
        %v1230 = vmul.f32 %v1229, 0.6931472
        %v1231 = vadd.f32 %v1088, %v1200
        %v1232 = vadd.f32 %v1090, %v1202
        %v1233 = vadd.f32 %v1092, %v1204
        %v1234 = vadd.f32 %v1094, %v1206
        %v1235 = vadd.f32 %v1096, %v1208
        %v1236 = vadd.f32 %v1098, %v1210
        %v1237 = vadd.f32 %v1100, %v1212
        %v1238 = vadd.f32 %v1102, %v1214
        %v1239 = vadd.f32 %v1104, %v1216
        %v1240 = vadd.f32 %v1106, %v1218
        %v1241 = vadd.f32 %v1108, %v1220
        %v1242 = vadd.f32 %v1110, %v1222
        %v1243 = vadd.f32 %v1112, %v1224
        %v1244 = vadd.f32 %v1114, %v1226
        %v1245 = vadd.f32 %v1116, %v1228
        %v1246 = vadd.f32 %v1118, %v1230
        %1247 = vset.pattern.permute.xlu0 0
        %1248 = vperm.xlu0 %1247, %v1052
        %v1249 = vpop.permute.xlu0 %1248
        %1250 = vset.pattern.permute.xlu0 0
        %1251 = vperm.xlu0 %1250, %v1053
        %v1252 = vpop.permute.xlu0 %1251
        %1253 = vset.pattern.permute.xlu0 0
        %1254 = vperm.xlu0 %1253, %v1054
        %v1255 = vpop.permute.xlu0 %1254
        %1256 = vset.pattern.permute.xlu0 0
        %1257 = vperm.xlu0 %1256, %v1055
        %v1258 = vpop.permute.xlu0 %1257
        %1259 = vset.pattern.permute.xlu0 0
        %1260 = vperm.xlu0 %1259, %v1056
        %v1261 = vpop.permute.xlu0 %1260
        %1262 = vset.pattern.permute.xlu0 0
        %1263 = vperm.xlu0 %1262, %v1057
        %v1264 = vpop.permute.xlu0 %1263
        %1265 = vset.pattern.permute.xlu0 0
        %1266 = vperm.xlu0 %1265, %v1058
        %v1267 = vpop.permute.xlu0 %1266
        %1268 = vset.pattern.permute.xlu0 0
        %1269 = vperm.xlu0 %1268, %v1059
        %v1270 = vpop.permute.xlu0 %1269
        %1271 = vset.pattern.permute.xlu0 0
        %1272 = vperm.xlu0 %1271, %v1060
        %v1273 = vpop.permute.xlu0 %1272
        %1274 = vset.pattern.permute.xlu0 0
        %1275 = vperm.xlu0 %1274, %v1061
        %v1276 = vpop.permute.xlu0 %1275
        %1277 = vset.pattern.permute.xlu0 0
        %1278 = vperm.xlu0 %1277, %v1062
        %v1279 = vpop.permute.xlu0 %1278
        %1280 = vset.pattern.permute.xlu0 0
        %1281 = vperm.xlu0 %1280, %v1063
        %v1282 = vpop.permute.xlu0 %1281
        %1283 = vset.pattern.permute.xlu0 0
        %1284 = vperm.xlu0 %1283, %v1064
        %v1285 = vpop.permute.xlu0 %1284
        %1286 = vset.pattern.permute.xlu0 0
        %1287 = vperm.xlu0 %1286, %v1065
        %v1288 = vpop.permute.xlu0 %1287
        %1289 = vset.pattern.permute.xlu0 0
        %1290 = vperm.xlu0 %1289, %v1066
        %v1291 = vpop.permute.xlu0 %1290
        %1292 = vset.pattern.permute.xlu0 0
        %1293 = vperm.xlu0 %1292, %v1067
        %v1294 = vpop.permute.xlu0 %1293
        %vm1295 = vcmp.eq.s32.totalorder %v1069, %v1249
        %vm1296 = vcmp.eq.s32.totalorder %v1069, %v1252
        %vm1297 = vcmp.eq.s32.totalorder %v1069, %v1255
        %vm1298 = vcmp.eq.s32.totalorder %v1069, %v1258
        %vm1299 = vcmp.eq.s32.totalorder %v1069, %v1261
        %vm1300 = vcmp.eq.s32.totalorder %v1069, %v1264
        %vm1301 = vcmp.eq.s32.totalorder %v1069, %v1267
        %vm1302 = vcmp.eq.s32.totalorder %v1069, %v1270
        %vm1303 = vcmp.eq.s32.totalorder %v1069, %v1273
        %vm1304 = vcmp.eq.s32.totalorder %v1069, %v1276
        %vm1305 = vcmp.eq.s32.totalorder %v1069, %v1279
        %vm1306 = vcmp.eq.s32.totalorder %v1069, %v1282
        %vm1307 = vcmp.eq.s32.totalorder %v1069, %v1285
        %vm1308 = vcmp.eq.s32.totalorder %v1069, %v1288
        %vm1309 = vcmp.eq.s32.totalorder %v1069, %v1291
        %vm1310 = vcmp.eq.s32.totalorder %v1069, %v1294
        %v1311 = vsel %vm1295, %v1020, 0.0
        %v1312 = vsel %vm1296, %v1021, 0.0
        %v1313 = vsel %vm1297, %v1022, 0.0
        %v1314 = vsel %vm1298, %v1023, 0.0
        %v1315 = vsel %vm1299, %v1024, 0.0
        %v1316 = vsel %vm1300, %v1025, 0.0
        %v1317 = vsel %vm1301, %v1026, 0.0
        %v1318 = vsel %vm1302, %v1027, 0.0
        %v1319 = vsel %vm1303, %v1028, 0.0
        %v1320 = vsel %vm1304, %v1029, 0.0
        %v1321 = vsel %vm1305, %v1030, 0.0
        %v1322 = vsel %vm1306, %v1031, 0.0
        %v1323 = vsel %vm1307, %v1032, 0.0
        %v1324 = vsel %vm1308, %v1033, 0.0
        %v1325 = vsel %vm1309, %v1034, 0.0
        %v1326 = vsel %vm1310, %v1035, 0.0
        %1327 = vadd.xlane.f32.xlu0 %v1311
        %v1328 = vpop.xlane.xlu0 %1327
        %1329 = vadd.xlane.f32.xlu0 %v1312
        %v1330 = vpop.xlane.xlu0 %1329
        %1331 = vadd.xlane.f32.xlu0 %v1313
        %v1332 = vpop.xlane.xlu0 %1331
        %1333 = vadd.xlane.f32.xlu0 %v1314
        %v1334 = vpop.xlane.xlu0 %1333
        %1335 = vadd.xlane.f32.xlu0 %v1315
        %v1336 = vpop.xlane.xlu0 %1335
        %1337 = vadd.xlane.f32.xlu0 %v1316
        %v1338 = vpop.xlane.xlu0 %1337
        %1339 = vadd.xlane.f32.xlu0 %v1317
        %v1340 = vpop.xlane.xlu0 %1339
        %1341 = vadd.xlane.f32.xlu0 %v1318
        %v1342 = vpop.xlane.xlu0 %1341
        %1343 = vadd.xlane.f32.xlu0 %v1319
        %v1344 = vpop.xlane.xlu0 %1343
        %1345 = vadd.xlane.f32.xlu0 %v1320
        %v1346 = vpop.xlane.xlu0 %1345
        %1347 = vadd.xlane.f32.xlu0 %v1321
        %v1348 = vpop.xlane.xlu0 %1347
        %1349 = vadd.xlane.f32.xlu0 %v1322
        %v1350 = vpop.xlane.xlu0 %1349
        %1351 = vadd.xlane.f32.xlu0 %v1323
        %v1352 = vpop.xlane.xlu0 %1351
        %1353 = vadd.xlane.f32.xlu0 %v1324
        %v1354 = vpop.xlane.xlu0 %1353
        %1355 = vadd.xlane.f32.xlu0 %v1325
        %v1356 = vpop.xlane.xlu0 %1355
        %1357 = vadd.xlane.f32.xlu0 %v1326
        %v1358 = vpop.xlane.xlu0 %1357
        %vm1359 = vcmp.ge.s32.totalorder %v1052, 0
        %vm1360 = vcmp.ge.s32.totalorder %v1053, 0
        %vm1361 = vcmp.ge.s32.totalorder %v1054, 0
        %vm1362 = vcmp.ge.s32.totalorder %v1055, 0
        %vm1363 = vcmp.ge.s32.totalorder %v1056, 0
        %vm1364 = vcmp.ge.s32.totalorder %v1057, 0
        %vm1365 = vcmp.ge.s32.totalorder %v1058, 0
        %vm1366 = vcmp.ge.s32.totalorder %v1059, 0
        %vm1367 = vcmp.ge.s32.totalorder %v1060, 0
        %vm1368 = vcmp.ge.s32.totalorder %v1061, 0
        %vm1369 = vcmp.ge.s32.totalorder %v1062, 0
        %vm1370 = vcmp.ge.s32.totalorder %v1063, 0
        %vm1371 = vcmp.ge.s32.totalorder %v1064, 0
        %vm1372 = vcmp.ge.s32.totalorder %v1065, 0
        %vm1373 = vcmp.ge.s32.totalorder %v1066, 0
        %vm1374 = vcmp.ge.s32.totalorder %v1067, 0
        %v1375 = vsel %vm1359, 1, 0
        %v1376 = vsel %vm1360, 1, 0
        %v1377 = vsel %vm1361, 1, 0
        %v1378 = vsel %vm1362, 1, 0
        %v1379 = vsel %vm1363, 1, 0
        %v1380 = vsel %vm1364, 1, 0
        %v1381 = vsel %vm1365, 1, 0
        %v1382 = vsel %vm1366, 1, 0
        %v1383 = vsel %vm1367, 1, 0
        %v1384 = vsel %vm1368, 1, 0
        %v1385 = vsel %vm1369, 1, 0
        %v1386 = vsel %vm1370, 1, 0
        %v1387 = vsel %vm1371, 1, 0
        %v1388 = vsel %vm1372, 1, 0
        %v1389 = vsel %vm1373, 1, 0
        %v1390 = vsel %vm1374, 1, 0
        %v1391 = vcvt.s32.f32 %v1375
        %v1392 = vcvt.s32.f32 %v1376
        %v1393 = vcvt.s32.f32 %v1377
        %v1394 = vcvt.s32.f32 %v1378
        %v1395 = vcvt.s32.f32 %v1379
        %v1396 = vcvt.s32.f32 %v1380
        %v1397 = vcvt.s32.f32 %v1381
        %v1398 = vcvt.s32.f32 %v1382
        %v1399 = vcvt.s32.f32 %v1383
        %v1400 = vcvt.s32.f32 %v1384
        %v1401 = vcvt.s32.f32 %v1385
        %v1402 = vcvt.s32.f32 %v1386
        %v1403 = vcvt.s32.f32 %v1387
        %v1404 = vcvt.s32.f32 %v1388
        %v1405 = vcvt.s32.f32 %v1389
        %v1406 = vcvt.s32.f32 %v1390
        %v1407 = vsub.f32 %v1231, %v1328
        %v1408 = vsub.f32 %v1232, %v1330
        %v1409 = vsub.f32 %v1233, %v1332
        %v1410 = vsub.f32 %v1234, %v1334
        %v1411 = vsub.f32 %v1235, %v1336
        %v1412 = vsub.f32 %v1236, %v1338
        %v1413 = vsub.f32 %v1237, %v1340
        %v1414 = vsub.f32 %v1238, %v1342
        %v1415 = vsub.f32 %v1239, %v1344
        %v1416 = vsub.f32 %v1240, %v1346
        %v1417 = vsub.f32 %v1241, %v1348
        %v1418 = vsub.f32 %v1242, %v1350
        %v1419 = vsub.f32 %v1243, %v1352
        %v1420 = vsub.f32 %v1244, %v1354
        %v1421 = vsub.f32 %v1245, %v1356
        %v1422 = vsub.f32 %v1246, %v1358
        %v1423 = vmul.f32 %v1407, %v1391
        %v1424 = vmul.f32 %v1408, %v1392
        %v1425 = vmul.f32 %v1409, %v1393
        %v1426 = vmul.f32 %v1410, %v1394
        %v1427 = vmul.f32 %v1411, %v1395
        %v1428 = vmul.f32 %v1412, %v1396
        %v1429 = vmul.f32 %v1413, %v1397
        %v1430 = vmul.f32 %v1414, %v1398
        %v1431 = vmul.f32 %v1415, %v1399
        %v1432 = vmul.f32 %v1416, %v1400
        %v1433 = vmul.f32 %v1417, %v1401
        %v1434 = vmul.f32 %v1418, %v1402
        %v1435 = vmul.f32 %v1419, %v1403
        %v1436 = vmul.f32 %v1420, %v1404
        %v1437 = vmul.f32 %v1421, %v1405
        %v1438 = vmul.f32 %v1422, %v1406
        %vm1439 = vcmask 7168
        %v1440 = vsel %vm1439, %v1423, 0.0
        %v1441 = vsel %vm1439, %v1424, 0.0
        %v1442 = vadd.f32 %v1440, %v1441
        %v1443 = vsel %vm1439, %v1425, 0.0
        %v1444 = vadd.f32 %v1442, %v1443
        %v1445 = vsel %vm1439, %v1426, 0.0
        %v1446 = vadd.f32 %v1444, %v1445
        %v1447 = vsel %vm1439, %v1427, 0.0
        %v1448 = vadd.f32 %v1446, %v1447
        %v1449 = vsel %vm1439, %v1428, 0.0
        %v1450 = vadd.f32 %v1448, %v1449
        %v1451 = vsel %vm1439, %v1429, 0.0
        %v1452 = vadd.f32 %v1450, %v1451
        %v1453 = vsel %vm1439, %v1430, 0.0
        %v1454 = vadd.f32 %v1452, %v1453
        %v1455 = vsel %vm1439, %v1431, 0.0
        %v1456 = vadd.f32 %v1454, %v1455
        %v1457 = vsel %vm1439, %v1432, 0.0
        %v1458 = vadd.f32 %v1456, %v1457
        %v1459 = vsel %vm1439, %v1433, 0.0
        %v1460 = vadd.f32 %v1458, %v1459
        %v1461 = vsel %vm1439, %v1434, 0.0
        %v1462 = vadd.f32 %v1460, %v1461
        %v1463 = vsel %vm1439, %v1435, 0.0
        %v1464 = vadd.f32 %v1462, %v1463
        %v1465 = vsel %vm1439, %v1436, 0.0
        %v1466 = vadd.f32 %v1464, %v1465
        %v1467 = vsel %vm1439, %v1437, 0.0
        %v1468 = vadd.f32 %v1466, %v1467
        %v1469 = vsel %vm1439, %v1438, 0.0
        %v1470 = vadd.f32 %v1468, %v1469
        %1471 = vadd.xlane.f32.xlu0 %v1470
        %v1472 = vpop.xlane.xlu0 %1471
        %v1473 = vrot.slane %v1472, 4
        %v1474 = vadd.f32 %v1472, %v1473
        %v1475 = vrot.slane %v1474, 2
        %v1476 = vadd.f32 %v1474, %v1475
        %v1477 = vrot.slane %v1476, 1
        %v1478 = vadd.f32 %v1476, %v1477
        %s1479 = vtos %v1478
        %v1480 = vsel %vm1439, %v1391, 0.0
        %v1481 = vsel %vm1439, %v1392, 0.0
        %v1482 = vadd.f32 %v1480, %v1481
        %v1483 = vsel %vm1439, %v1393, 0.0
        %v1484 = vadd.f32 %v1482, %v1483
        %v1485 = vsel %vm1439, %v1394, 0.0
        %v1486 = vadd.f32 %v1484, %v1485
        %v1487 = vsel %vm1439, %v1395, 0.0
        %v1488 = vadd.f32 %v1486, %v1487
        %v1489 = vsel %vm1439, %v1396, 0.0
        %v1490 = vadd.f32 %v1488, %v1489
        %v1491 = vsel %vm1439, %v1397, 0.0
        %v1492 = vadd.f32 %v1490, %v1491
        %v1493 = vsel %vm1439, %v1398, 0.0
        %v1494 = vadd.f32 %v1492, %v1493
        %v1495 = vsel %vm1439, %v1399, 0.0
        %v1496 = vadd.f32 %v1494, %v1495
        %v1497 = vsel %vm1439, %v1400, 0.0
        %v1498 = vadd.f32 %v1496, %v1497
        %v1499 = vsel %vm1439, %v1401, 0.0
        %v1500 = vadd.f32 %v1498, %v1499
        %v1501 = vsel %vm1439, %v1402, 0.0
        %v1502 = vadd.f32 %v1500, %v1501
        %v1503 = vsel %vm1439, %v1403, 0.0
        %v1504 = vadd.f32 %v1502, %v1503
        %v1505 = vsel %vm1439, %v1404, 0.0
        %v1506 = vadd.f32 %v1504, %v1505
        %v1507 = vsel %vm1439, %v1405, 0.0
        %v1508 = vadd.f32 %v1506, %v1507
        %v1509 = vsel %vm1439, %v1406, 0.0
        %v1510 = vadd.f32 %v1508, %v1509
        %1511 = vadd.xlane.f32.xlu0 %v1510
        %v1512 = vpop.xlane.xlu0 %1511
        %v1513 = vrot.slane %v1512, 4
        %v1514 = vadd.f32 %v1512, %v1513
        %v1515 = vrot.slane %v1514, 2
        %v1516 = vadd.f32 %v1514, %v1515
        %v1517 = vrot.slane %v1516, 1
        %v1518 = vadd.f32 %v1516, %v1517
        %s1519 = vtos %v1518
        %v1520 = vlaneseq
        %v1521 = vshrl.u32 %v1520, 7
        %vm1522 = vcmp.eq.s32.totalorder %v1521, 0
        %v1523 = vstv %s1479
        %v1524 = vsel %vm1522, %v1523, 0.0
        %vm1525 = vcmp.eq.s32.totalorder %v1521, 1
        %v1526 = vstv %s1519
        %v1527 = vsel %vm1525, %v1526, 0.0
        %v1528 = vadd.f32 %v1524, %v1527
        %1529 = vst [vmem:[%s331] sm:$0xff] %v1528
        %s1530 = sand.u32 %s179, 1
        %s1531 = scalar_lea.sflag [#allocation3], %s1530
        %s1532 = sand.u32 %s179, 1
        %s1533 = smul.addr %s1532, 128
        %s1534 = scalar_lea.vmem [#allocation2], %s1533
        %s1535 = sand.u32 %s205, 1
        %s1536 = scalar_lea.sflag [#allocation5], %s1535
        %s1537 = sand.u32 %s205, 1
        %s1538 = smul.addr %s1537, 8
        %s1539 = scalar_lea.vmem [#allocation4], %s1538
        // Predicated region
        $region45: #{tpu_custom_call.1} parent=43 // pred_check
          %p1540 = pneg %p189
        $region46: #{tpu_custom_call.1} parent=43 // pred_check_branch
          %1542 = sbr.rel (%p1540) target = $region48
        $region47: #{tpu_custom_call.1} parent=43 // pred_region
          %s1543 = smul.u32 16, %s25
          %s1545 = ssub.s32 2048, 2048
          %1546 = vsyncadd %s1531, %s1545
          %s1547 = smul.addr %s1543, 128
          %s1548 = scalar_lea.hbm %s6, %s1547
          %s1549 = sshll.u32 %s1534, 4
          %s1550 = int_to_ptr.vmem [resolvable:$true] %s1549
          %1555 = dma.vmem_to_hbm [thread:$0]  %s1550, 2048, %s1548, %s1531, 128, 128, 8
        $region48: #{tpu_custom_call.1} parent=43 // pred_fallthru
          _
        // Predicated region
        $region49: #{tpu_custom_call.1} parent=43 // pred_check
          %p1556 = pneg %p215
        $region50: #{tpu_custom_call.1} parent=43 // pred_check_branch
          %1558 = sbr.rel (%p1556) target = $region52
        $region51: #{tpu_custom_call.1} parent=43 // pred_region
          %s1560 = ssub.s32 128, 128
          %1561 = vsyncadd %s1536, %s1560
          %s1562 = smul.addr %s25, 128
          %s1563 = scalar_lea.hbm %s7, %s1562
          %s1565 = sshll.u32 %s1539, 4
          %s1566 = int_to_ptr.vmem [resolvable:$true] %s1565
          %1568 = dma.vmem_to_hbm [thread:$0]  %s1566, 128, %s1563, %s1536
        $region52: #{tpu_custom_call.1} parent=43 // pred_fallthru
          _
      $region44: #{tpu_custom_call.1} parent=5 // pred_fallthru
        _
      %p1569 = scmp.le.s32.totalorder 2, %s20
      // Predicated region
      $region53: #{tpu_custom_call.1} parent=5 // pred_check
        %p1570 = pneg %p1569
      $region54: #{tpu_custom_call.1} parent=5 // pred_check_branch
        %1572 = sbr.rel (%p1570) target = $region56
      $region55: #{tpu_custom_call.1} parent=5 // pred_region
        %s1573 = ssub.s32 %s20, 2
        // Predicated region
        $region57: #{tpu_custom_call.1} parent=55 // pred_check
          %p1574 = pneg %p195
        $region58: #{tpu_custom_call.1} parent=55 // pred_check_branch
          %1576 = sbr.rel (%p1574) target = $region60
        $region59: #{tpu_custom_call.1} parent=55 // pred_region
          %s1577 = sand.u32 %s180, 1
          %s1578 = scalar_lea.sflag [#allocation3], %s1577
          %s1579 = sand.u32 %s180, 1
          %s1580 = smul.addr %s1579, 128
          %s1581 = scalar_lea.vmem [#allocation2], %s1580
          %1582 = dma.done %s1578, 2048
        $region60: #{tpu_custom_call.1} parent=55 // pred_fallthru
          _
        // Predicated region
        $region61: #{tpu_custom_call.1} parent=55 // pred_check
          %p1583 = pneg %p221
        $region62: #{tpu_custom_call.1} parent=55 // pred_check_branch
          %1585 = sbr.rel (%p1583) target = $region64
        $region63: #{tpu_custom_call.1} parent=55 // pred_region
          %s1586 = sand.u32 %s206, 1
          %s1587 = scalar_lea.sflag [#allocation5], %s1586
          %s1588 = sand.u32 %s206, 1
          %s1589 = smul.addr %s1588, 8
          %s1590 = scalar_lea.vmem [#allocation4], %s1589
          %1591 = dma.done %s1587, 128
        $region64: #{tpu_custom_call.1} parent=55 // pred_fallthru
          _
      $region56: #{tpu_custom_call.1} parent=5 // pred_fallthru
        _
    $region6: #{tpu_custom_call.1} parent=1 // loop_footer
      %s24 = sadd.s32 1, %s20
    $region7: #{tpu_custom_call.1} parent=1 // loop_footer_branch
      %19 = sbr.rel target = $region3
    $region8: #{tpu_custom_call.1} parent=1 // loop_exit
      _
    %1592 = vsyncpa [#allocation3], 1
    %s1593 = scalar_lea.sflag [#allocation3], 1
    %1594 = vsyncpa %s1593, 1
    %1595 = vsyncpa [#allocation5], 1
    %s1596 = scalar_lea.sflag [#allocation5], 1
    %1597 = vsyncpa %s1596, 1

</llo_original>
